<compile_context>
chip_gen: v5e
topology: v5e:2x2
jax: 0.10.0
libtpu: 0.0.40
codegen_flags: <defaults>
</compile_context>

<pallas_src>
import jax
import jax.numpy as jnp
from jax.experimental import pallas as pl
from jax.experimental.pallas import tpu as pltpu

INPUT_DIM = 120
HIDDEN = 50
LATENT = 3
OUT1 = 3
OUT2 = 3
SIG_DEPTH = 4       # depth-4 signature of a 3-d path: 3+9+27+81 = 120 = INPUT_DIM
HPAD = 128          # lane-padded hidden width
OPAD = 8            # lane-padded narrow width (latent / fused head logits)
TM_DEFAULT = 4096   # max encoder row tile (~4 MiB double-buffered in+out)


def _round_up(x, m):
    return (x + m - 1) // m * m


def _cdiv(a, b):
    return (a + b - 1) // b


# ----------------------------------------------------------------------------
# Pallas kernels
# ----------------------------------------------------------------------------
def _encoder_kernel(x_ref, w1_ref, b1_ref, w2_ref, b2_ref, o_ref):
    """Frame encoder: Linear(120,50)+ReLU -> Linear(50,3)+ReLU, f32 matmuls.
    x block: [tm, 120]; output block: [tm, 8] (cols 0:3 valid latent)."""
    x = x_ref[...]
    # Fused NaN-frame masking (padding frames are NaN in the dataset).
    x = jnp.where(jnp.isnan(x), 0.0, x)
    h = jnp.dot(x, w1_ref[...], preferred_element_type=jnp.float32)
    h = jnp.maximum(h + b1_ref[...], 0.0)
    y = jnp.dot(h, w2_ref[...], preferred_element_type=jnp.float32)
    o_ref[...] = jnp.maximum(y + b2_ref[...], 0.0)


def _heads_kernel(z_ref, ew1_ref, eb1_ref, ew2_ref, eb2_ref,
                  cw1_ref, cb1_ref, cw2_ref, cb2_ref, o_ref):
    """Shared encoder + fused decoder1/decoder2 + masked log_softmax.
    z block: [B_pad, 120]; output block: [B_pad, 8]
    (cols 0:3 = log_softmax head1, 3:6 = log_softmax head2)."""
    z = z_ref[...]
    # shared encoder
    h = jnp.maximum(
        jnp.dot(z, ew1_ref[...], preferred_element_type=jnp.float32) + eb1_ref[...], 0.0)
    y = jnp.maximum(
        jnp.dot(h, ew2_ref[...], preferred_element_type=jnp.float32) + eb2_ref[...], 0.0)
    # fused decoder1 + decoder2 (block-packed weights)
    hh = jnp.maximum(
        jnp.dot(y, cw1_ref[...], preferred_element_type=jnp.float32) + cb1_ref[...], 0.0)
    oo = jnp.maximum(
        jnp.dot(hh, cw2_ref[...], preferred_element_type=jnp.float32) + cb2_ref[...], 0.0)

    # masked log_softmax over the 8 output lanes: head1 in [0,3), head2 in [3,6)
    col = jax.lax.broadcasted_iota(jnp.int32, oo.shape, 1)
    mask1 = col < OUT1
    mask2 = jnp.logical_and(col >= OUT1, col < OUT1 + OUT2)
    neg = jnp.float32(-1e30)

    def masked_log_softmax(mask):
        mm = jnp.where(mask, oo, neg)
        m = jnp.max(mm, axis=-1, keepdims=True)
        s = jnp.sum(jnp.where(mask, jnp.exp(oo - m), 0.0), axis=-1, keepdims=True)
        return oo - m - jnp.log(s)

    ls1 = masked_log_softmax(mask1)
    ls2 = masked_log_softmax(mask2)
    o_ref[...] = jnp.where(mask1, ls1, jnp.where(mask2, ls2, 0.0))


# ----------------------------------------------------------------------------
# Pallas wrappers
# ----------------------------------------------------------------------------
def encoder_forward(x, pp, tm_max=TM_DEFAULT):
    """x: [M, 120] f32 (NaN rows allowed) -> [M, 8] f32 (cols 0:3 = latent)."""
    M = x.shape[0]
    # >= 2 grid steps when possible (v7x megacore), near-zero row-pad waste.
    nblocks = max(_cdiv(M, tm_max), min(2, _cdiv(M, 8)), 1)
    tm = _round_up(_cdiv(M, nblocks), 8)
    m_pad = _round_up(M, tm)
    if m_pad != M:
        x = jnp.pad(x, ((0, m_pad - M), (0, 0)))
    grid = (m_pad // tm,)
    out = pl.pallas_call(
        _encoder_kernel,
        grid=grid,
        in_specs=[
            pl.BlockSpec((tm, INPUT_DIM), lambda i: (i, 0)),
            pl.BlockSpec((INPUT_DIM, HPAD), lambda i: (0, 0)),
            pl.BlockSpec((1, HPAD), lambda i: (0, 0)),
            pl.BlockSpec((HPAD, OPAD), lambda i: (0, 0)),
            pl.BlockSpec((1, OPAD), lambda i: (0, 0)),
        ],
        out_specs=pl.BlockSpec((tm, OPAD), lambda i: (i, 0)),
        out_shape=jax.ShapeDtypeStruct((m_pad, OPAD), jnp.float32),
        compiler_params=pltpu.CompilerParams(
            dimension_semantics=("parallel",)),
    )(x, pp["enc_w1"], pp["enc_b1"], pp["enc_w2"], pp["enc_b2"])
    return out[:M]


def heads_forward(z, pp):
    """z: [B_pad, 120] -> [B_pad, 8]; B_pad must be a multiple of 8."""
    bp = z.shape[0]
    args = (z,
            pp["enc_w1"], pp["enc_b1"], pp["enc_w2"], pp["enc_b2"],
            pp["dc_w1"], pp["dc_b1"], pp["dc_w2"], pp["dc_b2"])

    def full_spec(a):
        nd = a.ndim
        return pl.BlockSpec(a.shape, lambda *_: (0,) * nd)

    return pl.pallas_call(
        _heads_kernel,
        grid=(1,),
        in_specs=[full_spec(a) for a in args],
        out_specs=pl.BlockSpec((bp, OPAD), lambda i: (0, 0)),
        out_shape=jax.ShapeDtypeStruct((bp, OPAD), jnp.float32),
    )(*args)


# ----------------------------------------------------------------------------
# Path signature (signatory.signature equivalent)
#   Time-parallel Chen identity: 4 cumsums over T + batched outer products,
#   no per-timestep scan.  Increments past a sample's length are masked to
#   zero (exp(0) = identity in the tensor algebra).  Levels flattened C-order
#   and concatenated (signatory ordering).
# ----------------------------------------------------------------------------
def path_signature_batched(lat, lengths, depth=SIG_DEPTH):
    B, T, d = lat.shape
    lat = lat.astype(jnp.float32)
    sig_width = sum(d ** (k + 1) for k in range(depth))
    if T < 2:
        return jnp.zeros((B, sig_width), jnp.float32)

    dl = lat[:, 1:, :] - lat[:, :-1, :]                         # [B, T-1, d]
    valid = (jnp.arange(1, T)[None, :] < lengths[:, None])      # [B, T-1]
    dl = jnp.where(valid[:, :, None], dl, 0.0)

    def outer(a, b):   # [B,T-1,m] x [B,T-1,n] -> [B,T-1,m*n] (C-order)
        return (a[..., :, None] * b[..., None, :]).reshape(B, T - 1, -1)

    # E[k] = delta^{(x)(k+1)} / (k+1)!   (per time step)
    E = [dl]
    for k in range(1, depth):
        E.append(outer(E[-1], dl) / (k + 1.0))

    # Level k increment at step t: E_k + sum_i S_{t-1}^{(i)} (x) E_{k-i};
    # exclusive running levels S_{t-1}^{(i)} come from (cumsum - increment).
    finals, prev_excl = [], []
    for k in range(depth):
        a_k = E[k]
        for i in range(k):
            a_k = a_k + outer(prev_excl[i], E[k - 1 - i])
        Lk = jnp.cumsum(a_k, axis=1)            # running level-(k+1) signature
        finals.append(Lk[:, -1])
        prev_excl.append(Lk - a_k)              # S_{t-1}^{(k+1)}
    return jnp.concatenate(finals, axis=-1)     # [B, 120] for d=3, depth=4


def _path_signature_scan(lat, lengths, depth=SIG_DEPTH):
    """Independent step-by-step Chen-identity implementation (lax.scan over
    time).  Used only as a correctness reference."""
    B, T, d = lat.shape
    lat = lat.astype(jnp.float32)
    dl = lat[:, 1:, :] - lat[:, :-1, :]
    valid = (jnp.arange(1, T)[None, :] < lengths[:, None])
    dl = jnp.where(valid[:, :, None], dl, 0.0)

    def outer(a, b):
        return (a[:, :, None] * b[:, None, :]).reshape(a.shape[0], -1)

    def step(levels, delta):
        exp_lv = [delta]
        for k in range(1, depth):
            exp_lv.append(outer(exp_lv[-1], delta) / (k + 1))
        new_levels = []
        for k in range(depth):
            acc = levels[k] + exp_lv[k]
            for i in range(k):
                acc = acc + outer(levels[i], exp_lv[k - 1 - i])
            new_levels.append(acc)
        return new_levels, None

    init = [jnp.zeros((B, d ** (k + 1)), jnp.float32) for k in range(depth)]
    levels, _ = jax.lax.scan(step, init, jnp.swapaxes(dl, 0, 1))
    return jnp.concatenate(levels, axis=-1)


# ----------------------------------------------------------------------------
# Full forward pass (Net_multitask.forward, encoder_type='FC')
# ----------------------------------------------------------------------------
def net_multitask_forward(batch, samples_len, pp):
    B, T, D = batch.shape
    M = B * T

    # Stage 1: frame encoder on all frames (raw [M,120] f32, no lane-pad pass;
    # NaN frames masked in-kernel and excluded from the signature by length).
    latents = encoder_forward(batch.reshape(M, D), pp)[:, :LATENT]
    latents = latents.reshape(B, T, LATENT)

    # Stage 2: per-video depth-N path signature (time-parallel, no scan).
    sigs = path_signature_batched(latents, samples_len, SIG_DEPTH)   # [B, 120]

    first_frame = jnp.nan_to_num(batch[:, 0, :], nan=0.0)
    gt1 = (samples_len > 1)[:, None]
    eq1 = (samples_len == 1)[:, None]
    output = jnp.where(gt1, sigs, jnp.where(eq1, first_frame, 0.0))  # [B, 120]

    # Stage 3: shared encoder + decoder1/decoder2 + log_softmax, fused kernel.
    b_pad = _round_up(B, 8)
    z = jnp.pad(output, ((0, b_pad - B), (0, 0)))                    # [B_pad, 120]
    out = heads_forward(z, pp)                                       # [B_pad, 8]
    return out[:B, :OUT1], out[:B, OUT1:OUT1 + OUT2]


# ----------------------------------------------------------------------------
# Parameters: logical shapes from Net_multitask.__init__ (FC branch) and the
# packing into the lane-padded / head-fused layout the kernels expect.
# ----------------------------------------------------------------------------
def init_params(key):
    ks = jax.random.split(key, 12)
    n = lambda k, shape, s=0.05: (s * jax.random.normal(k, shape)).astype(jnp.float32)
    return {
        # encoder: Linear(120, 50) -> ReLU -> Linear(50, 3) -> ReLU
        "enc_w1": n(ks[0], (INPUT_DIM, HIDDEN)), "enc_b1": n(ks[1], (1, HIDDEN)),
        "enc_w2": n(ks[2], (HIDDEN, LATENT)),    "enc_b2": n(ks[3], (1, LATENT)),
        # decoder1: Linear(3, 50) -> ReLU -> Linear(50, 3) -> ReLU
        "d1_w1": n(ks[4], (LATENT, HIDDEN)),  "d1_b1": n(ks[5], (1, HIDDEN)),
        "d1_w2": n(ks[6], (HIDDEN, OUT1)),    "d1_b2": n(ks[7], (1, OUT1)),
        # decoder2: Linear(3, 50) -> ReLU -> Linear(50, 3) -> ReLU
        "d2_w1": n(ks[8], (LATENT, HIDDEN)),  "d2_b1": n(ks[9], (1, HIDDEN)),
        "d2_w2": n(ks[10], (HIDDEN, OUT2)),   "d2_b2": n(ks[11], (1, OUT2)),
    }


def pack_params(p):
    """Zero-pad (numerically exact) to kernel-friendly shapes and fuse the two
    decoders:  enc_w1 [120,128], enc_b1 [1,128], enc_w2 [128,8], enc_b2 [1,8],
    dc_w1 [8,128] (hidden cols 0:50 dec1 / 50:100 dec2), dc_b1 [1,128],
    dc_w2 [128,8] (logit cols 0:3 / 3:6), dc_b2 [1,8]."""
    f32 = jnp.float32
    enc_w1 = jnp.zeros((INPUT_DIM, HPAD), f32).at[:, :HIDDEN].set(p["enc_w1"])
    enc_b1 = jnp.zeros((1, HPAD), f32).at[:, :HIDDEN].set(p["enc_b1"])
    enc_w2 = jnp.zeros((HPAD, OPAD), f32).at[:HIDDEN, :LATENT].set(p["enc_w2"])
    enc_b2 = jnp.zeros((1, OPAD), f32).at[:, :LATENT].set(p["enc_b2"])

    dc_w1 = (jnp.zeros((OPAD, HPAD), f32)
             .at[:LATENT, :HIDDEN].set(p["d1_w1"])
             .at[:LATENT, HIDDEN:2 * HIDDEN].set(p["d2_w1"]))
    dc_b1 = (jnp.zeros((1, HPAD), f32)
             .at[:, :HIDDEN].set(p["d1_b1"])
             .at[:, HIDDEN:2 * HIDDEN].set(p["d2_b1"]))
    dc_w2 = (jnp.zeros((HPAD, OPAD), f32)
             .at[:HIDDEN, :OUT1].set(p["d1_w2"])
             .at[HIDDEN:2 * HIDDEN, OUT1:OUT1 + OUT2].set(p["d2_w2"]))
    dc_b2 = (jnp.zeros((1, OPAD), f32)
             .at[:, :OUT1].set(p["d1_b2"])
             .at[:, OUT1:OUT1 + OUT2].set(p["d2_b2"]))

    return {"enc_w1": enc_w1, "enc_b1": enc_b1, "enc_w2": enc_w2, "enc_b2": enc_b2,
            "dc_w1": dc_w1, "dc_b1": dc_b1, "dc_w2": dc_w2, "dc_b2": dc_b2}


# ----------------------------------------------------------------------------
# Pure-JAX reference (literal translation of the PyTorch forward) for checking.
# ----------------------------------------------------------------------------
def _reference_forward(batch, samples_len, p):
    hp = jax.lax.Precision.HIGHEST

    def linear(x, w, b):
        return jnp.dot(x, w, precision=hp) + b

    def encoder(x):
        h = jnp.maximum(linear(x, p["enc_w1"], p["enc_b1"]), 0.0)
        return jnp.maximum(linear(h, p["enc_w2"], p["enc_b2"]), 0.0)

    def decoder(x, w1, b1, w2, b2):
        h = jnp.maximum(linear(x, w1, b1), 0.0)
        return jnp.maximum(linear(h, w2, b2), 0.0)

    B, T, D = batch.shape
    frames = jnp.nan_to_num(batch.reshape(B * T, D), nan=0.0)
    lat = encoder(frames).reshape(B, T, LATENT)
    sigs = _path_signature_scan(lat, samples_len, SIG_DEPTH)

    first_frame = jnp.nan_to_num(batch[:, 0, :], nan=0.0)
    gt1 = (samples_len > 1)[:, None]
    eq1 = (samples_len == 1)[:, None]
    output = jnp.where(gt1, sigs, jnp.where(eq1, first_frame, 0.0))

    y = encoder(output)
    o1 = decoder(y, p["d1_w1"], p["d1_b1"], p["d1_w2"], p["d1_b2"])
    o2 = decoder(y, p["d2_w1"], p["d2_b1"], p["d2_w2"], p["d2_b2"])
    return jax.nn.log_softmax(o1, axis=-1), jax.nn.log_softmax(o2, axis=-1)


if __name__ == "__main__":
    key = jax.random.PRNGKey(0)
    k_batch, k_params = jax.random.split(key)

    B, T = 4, 8
    batch = jax.random.normal(k_batch, (B, T, INPUT_DIM), dtype=jnp.float32)
    samples_len = jnp.array([1, 3, 8, 1], dtype=jnp.int32)
    # NaN-pad frames past each sample's length (as the dataset padding does).
    t_idx = jnp.arange(T)[None, :, None]
    batch = jnp.where(t_idx < samples_len[:, None, None], batch, jnp.nan)

    raw_params = init_params(k_params)
    params = pack_params(raw_params)

    fwd = jax.jit(net_multitask_forward)
    out1, out2 = fwd(batch, samples_len, params)
    jax.block_until_ready((out1, out2))

    # Shape / finiteness / normalization checks.
    assert out1.shape == (B, OUT1) and out2.shape == (B, OUT2)
    assert bool(jnp.all(jnp.isfinite(out1))) and bool(jnp.all(jnp.isfinite(out2)))
    assert bool(jnp.all(jnp.abs(jnp.sum(jnp.exp(out1), axis=-1) - 1.0) < 1e-4))
    assert bool(jnp.all(jnp.abs(jnp.sum(jnp.exp(out2), axis=-1) - 1.0) < 1e-4))

    # Time-parallel signature must match the step-by-step Chen-identity scan.
    lat = encoder_forward(batch.reshape(B * T, INPUT_DIM), params)[:, :LATENT]
    lat = lat.reshape(B, T, LATENT)
    sig_fast = path_signature_batched(lat, samples_len)
    sig_scan = _path_signature_scan(lat, samples_len)
    assert bool(jnp.allclose(sig_fast, sig_scan, rtol=1e-4, atol=1e-5))

    # End-to-end check against a plain-JAX reference of the PyTorch forward.
    r1, r2 = jax.jit(_reference_forward)(batch, samples_len, raw_params)
    assert bool(jnp.allclose(out1, r1, rtol=5e-2, atol=5e-2))
    assert bool(jnp.allclose(out2, r2, rtol=5e-2, atol=5e-2))

    print("KERNEL_OK")
</pallas_src>

<mosaic_0001>
module attributes {stable_mosaic.version = 11 : i64} {
  func.func @_encoder_kernel(%arg0: i32, %arg1: memref<16x120xf32, #tpu.memory_space<vmem>>, %arg2: memref<120x128xf32, #tpu.memory_space<vmem>>, %arg3: memref<1x128xf32, #tpu.memory_space<vmem>>, %arg4: memref<128x8xf32, #tpu.memory_space<vmem>>, %arg5: memref<1x8xf32, #tpu.memory_space<vmem>>, %arg6: memref<16x8xf32, #tpu.memory_space<vmem>>) attributes {dimension_semantics = [#tpu.dimension_semantics<parallel>], iteration_bounds = array<i64: 2>, scalar_prefetch = 0 : i64, scratch_operands = 0 : i64, tpu.core_type = #tpu.core_type<tc>, window_params = [{transform_indices = @transform_0, window_bounds = array<i64: 16, 120>}, {pipeline_mode = #tpu.pipeline_mode<synchronous>, transform_indices = @transform_1, window_bounds = array<i64: 120, 128>}, {pipeline_mode = #tpu.pipeline_mode<synchronous>, transform_indices = @transform_2, window_bounds = array<i64: 1, 128>}, {pipeline_mode = #tpu.pipeline_mode<synchronous>, transform_indices = @transform_3, window_bounds = array<i64: 128, 8>}, {pipeline_mode = #tpu.pipeline_mode<synchronous>, transform_indices = @transform_4, window_bounds = array<i64: 1, 8>}, {transform_indices = @transform_5, window_bounds = array<i64: 16, 8>}]} {
    %c0 = arith.constant 0 : index
    %c0_0 = arith.constant 0 : index
    %0 = vector.load %arg1[%c0, %c0_0] : memref<16x120xf32, #tpu.memory_space<vmem>>, vector<16x120xf32>
    %1 = arith.cmpf one, %0, %0 : vector<16x120xf32>
    %cst = arith.constant 0.000000e+00 : f32
    %2 = vector.broadcast %cst : f32 to vector<16x120xf32>
    %3 = arith.select %1, %2, %0 : vector<16x120xi1>, vector<16x120xf32>
    %c0_1 = arith.constant 0 : index
    %c0_2 = arith.constant 0 : index
    %4 = vector.load %arg2[%c0_1, %c0_2] : memref<120x128xf32, #tpu.memory_space<vmem>>, vector<120x128xf32>
    %cst_3 = arith.constant dense<0.000000e+00> : vector<16x128xf32>
    %5 = tpu.matmul %3, %4, %cst_3 {dimension_numbers = #tpu.dot_dimension_numbers<[1], [0], [0], [1], [0, 0, 1, 1], [], []>} : vector<16x120xf32>, vector<120x128xf32>, vector<16x128xf32> -> vector<16x128xf32>
    %c0_4 = arith.constant 0 : index
    %c0_5 = arith.constant 0 : index
    %6 = vector.load %arg3[%c0_4, %c0_5] : memref<1x128xf32, #tpu.memory_space<vmem>>, vector<1x128xf32>
    %7 = vector.broadcast %6 : vector<1x128xf32> to vector<16x128xf32>
    %8 = arith.addf %5, %7 : vector<16x128xf32>
    %cst_6 = arith.constant 0.000000e+00 : f32
    %9 = vector.broadcast %cst_6 : f32 to vector<16x128xf32>
    %10 = arith.maximumf %8, %9 : vector<16x128xf32>
    %c0_7 = arith.constant 0 : index
    %c0_8 = arith.constant 0 : index
    %11 = vector.load %arg4[%c0_7, %c0_8] : memref<128x8xf32, #tpu.memory_space<vmem>>, vector<128x8xf32>
    %cst_9 = arith.constant dense<0.000000e+00> : vector<16x8xf32>
    %12 = tpu.matmul %10, %11, %cst_9 {dimension_numbers = #tpu.dot_dimension_numbers<[1], [0], [0], [1], [0, 0, 1, 1], [], []>} : vector<16x128xf32>, vector<128x8xf32>, vector<16x8xf32> -> vector<16x8xf32>
    %c0_10 = arith.constant 0 : index
    %c0_11 = arith.constant 0 : index
    %13 = vector.load %arg5[%c0_10, %c0_11] : memref<1x8xf32, #tpu.memory_space<vmem>>, vector<1x8xf32>
    %14 = vector.broadcast %13 : vector<1x8xf32> to vector<16x8xf32>
    %15 = arith.addf %12, %14 : vector<16x8xf32>
    %cst_12 = arith.constant 0.000000e+00 : f32
    %16 = vector.broadcast %cst_12 : f32 to vector<16x8xf32>
    %17 = arith.maximumf %15, %16 : vector<16x8xf32>
    %c0_13 = arith.constant 0 : index
    %c0_14 = arith.constant 0 : index
    %18 = vector.load %arg6[%c0_13, %c0_14] : memref<16x8xf32, #tpu.memory_space<vmem>>, vector<16x8xf32>
    tpu.vector_store %arg6[%c0_13, %c0_14], %17 {strides = array<i32>} : memref<16x8xf32, #tpu.memory_space<vmem>>, vector<16x8xf32>,
    return
  }
  func.func @transform_0(%arg0: i32) -> (i32, i32) {
    %c0_i32 = arith.constant 0 : i32
    %c0_i32_0 = arith.constant 0 : i32
    return %arg0, %c0_i32 : i32, i32
  }
  func.func @transform_1(%arg0: i32) -> (i32, i32) {
    %c0_i32 = arith.constant 0 : i32
    %c0_i32_0 = arith.constant 0 : i32
    %c0_i32_1 = arith.constant 0 : i32
    return %c0_i32, %c0_i32_0 : i32, i32
  }
  func.func @transform_2(%arg0: i32) -> (i32, i32) {
    %c0_i32 = arith.constant 0 : i32
    %c0_i32_0 = arith.constant 0 : i32
    %c0_i32_1 = arith.constant 0 : i32
    return %c0_i32, %c0_i32_0 : i32, i32
  }
  func.func @transform_3(%arg0: i32) -> (i32, i32) {
    %c0_i32 = arith.constant 0 : i32
    %c0_i32_0 = arith.constant 0 : i32
    %c0_i32_1 = arith.constant 0 : i32
    return %c0_i32, %c0_i32_0 : i32, i32
  }
  func.func @transform_4(%arg0: i32) -> (i32, i32) {
    %c0_i32 = arith.constant 0 : i32
    %c0_i32_0 = arith.constant 0 : i32
    %c0_i32_1 = arith.constant 0 : i32
    return %c0_i32, %c0_i32_0 : i32, i32
  }
  func.func @transform_5(%arg0: i32) -> (i32, i32) {
    %c0_i32 = arith.constant 0 : i32
    %c0_i32_0 = arith.constant 0 : i32
    return %arg0, %c0_i32 : i32, i32
  }
}

module attributes {stable_mosaic.version = 11 : i64} {
  func.func @_heads_kernel(%arg0: i32, %arg1: memref<8x120xf32, #tpu.memory_space<vmem>>, %arg2: memref<120x128xf32, #tpu.memory_space<vmem>>, %arg3: memref<1x128xf32, #tpu.memory_space<vmem>>, %arg4: memref<128x8xf32, #tpu.memory_space<vmem>>, %arg5: memref<1x8xf32, #tpu.memory_space<vmem>>, %arg6: memref<8x128xf32, #tpu.memory_space<vmem>>, %arg7: memref<1x128xf32, #tpu.memory_space<vmem>>, %arg8: memref<128x8xf32, #tpu.memory_space<vmem>>, %arg9: memref<1x8xf32, #tpu.memory_space<vmem>>, %arg10: memref<8x8xf32, #tpu.memory_space<vmem>>) attributes {dimension_semantics = [#tpu.dimension_semantics<arbitrary>], iteration_bounds = array<i64: 1>, scalar_prefetch = 0 : i64, scratch_operands = 0 : i64, tpu.core_type = #tpu.core_type<tc>, window_params = [{pipeline_mode = #tpu.pipeline_mode<synchronous>, transform_indices = @transform_0, window_bounds = array<i64: 8, 120>}, {pipeline_mode = #tpu.pipeline_mode<synchronous>, transform_indices = @transform_1, window_bounds = array<i64: 120, 128>}, {pipeline_mode = #tpu.pipeline_mode<synchronous>, transform_indices = @transform_2, window_bounds = array<i64: 1, 128>}, {pipeline_mode = #tpu.pipeline_mode<synchronous>, transform_indices = @transform_3, window_bounds = array<i64: 128, 8>}, {pipeline_mode = #tpu.pipeline_mode<synchronous>, transform_indices = @transform_4, window_bounds = array<i64: 1, 8>}, {pipeline_mode = #tpu.pipeline_mode<synchronous>, transform_indices = @transform_5, window_bounds = array<i64: 8, 128>}, {pipeline_mode = #tpu.pipeline_mode<synchronous>, transform_indices = @transform_6, window_bounds = array<i64: 1, 128>}, {pipeline_mode = #tpu.pipeline_mode<synchronous>, transform_indices = @transform_7, window_bounds = array<i64: 128, 8>}, {pipeline_mode = #tpu.pipeline_mode<synchronous>, transform_indices = @transform_8, window_bounds = array<i64: 1, 8>}, {pipeline_mode = #tpu.pipeline_mode<synchronous>, transform_indices = @transform_9, window_bounds = array<i64: 8, 8>}]} {
    %c0 = arith.constant 0 : index
    %c0_0 = arith.constant 0 : index
    %0 = vector.load %arg1[%c0, %c0_0] : memref<8x120xf32, #tpu.memory_space<vmem>>, vector<8x120xf32>
    %c0_1 = arith.constant 0 : index
    %c0_2 = arith.constant 0 : index
    %1 = vector.load %arg2[%c0_1, %c0_2] : memref<120x128xf32, #tpu.memory_space<vmem>>, vector<120x128xf32>
    %cst = arith.constant dense<0.000000e+00> : vector<8x128xf32>
    %2 = tpu.matmul %0, %1, %cst {dimension_numbers = #tpu.dot_dimension_numbers<[1], [0], [0], [1], [0, 0, 1, 1], [], []>} : vector<8x120xf32>, vector<120x128xf32>, vector<8x128xf32> -> vector<8x128xf32>
    %c0_3 = arith.constant 0 : index
    %c0_4 = arith.constant 0 : index
    %3 = vector.load %arg3[%c0_3, %c0_4] : memref<1x128xf32, #tpu.memory_space<vmem>>, vector<1x128xf32>
    %4 = vector.broadcast %3 : vector<1x128xf32> to vector<8x128xf32>
    %5 = arith.addf %2, %4 : vector<8x128xf32>
    %cst_5 = arith.constant 0.000000e+00 : f32
    %6 = vector.broadcast %cst_5 : f32 to vector<8x128xf32>
    %7 = arith.maximumf %5, %6 : vector<8x128xf32>
    %c0_6 = arith.constant 0 : index
    %c0_7 = arith.constant 0 : index
    %8 = vector.load %arg4[%c0_6, %c0_7] : memref<128x8xf32, #tpu.memory_space<vmem>>, vector<128x8xf32>
    %cst_8 = arith.constant dense<0.000000e+00> : vector<8x8xf32>
    %9 = tpu.matmul %7, %8, %cst_8 {dimension_numbers = #tpu.dot_dimension_numbers<[1], [0], [0], [1], [0, 0, 1, 1], [], []>} : vector<8x128xf32>, vector<128x8xf32>, vector<8x8xf32> -> vector<8x8xf32>
    %c0_9 = arith.constant 0 : index
    %c0_10 = arith.constant 0 : index
    %10 = vector.load %arg5[%c0_9, %c0_10] : memref<1x8xf32, #tpu.memory_space<vmem>>, vector<1x8xf32>
    %11 = vector.broadcast %10 : vector<1x8xf32> to vector<8x8xf32>
    %12 = arith.addf %9, %11 : vector<8x8xf32>
    %cst_11 = arith.constant 0.000000e+00 : f32
    %13 = vector.broadcast %cst_11 : f32 to vector<8x8xf32>
    %14 = arith.maximumf %12, %13 : vector<8x8xf32>
    %c0_12 = arith.constant 0 : index
    %c0_13 = arith.constant 0 : index
    %15 = vector.load %arg6[%c0_12, %c0_13] : memref<8x128xf32, #tpu.memory_space<vmem>>, vector<8x128xf32>
    %cst_14 = arith.constant dense<0.000000e+00> : vector<8x128xf32>
    %16 = tpu.matmul %14, %15, %cst_14 {dimension_numbers = #tpu.dot_dimension_numbers<[1], [0], [0], [1], [0, 0, 1, 1], [], []>} : vector<8x8xf32>, vector<8x128xf32>, vector<8x128xf32> -> vector<8x128xf32>
    %c0_15 = arith.constant 0 : index
    %c0_16 = arith.constant 0 : index
    %17 = vector.load %arg7[%c0_15, %c0_16] : memref<1x128xf32, #tpu.memory_space<vmem>>, vector<1x128xf32>
    %18 = vector.broadcast %17 : vector<1x128xf32> to vector<8x128xf32>
    %19 = arith.addf %16, %18 : vector<8x128xf32>
    %cst_17 = arith.constant 0.000000e+00 : f32
    %20 = vector.broadcast %cst_17 : f32 to vector<8x128xf32>
    %21 = arith.maximumf %19, %20 : vector<8x128xf32>
    %c0_18 = arith.constant 0 : index
    %c0_19 = arith.constant 0 : index
    %22 = vector.load %arg8[%c0_18, %c0_19] : memref<128x8xf32, #tpu.memory_space<vmem>>, vector<128x8xf32>
    %cst_20 = arith.constant dense<0.000000e+00> : vector<8x8xf32>
    %23 = tpu.matmul %21, %22, %cst_20 {dimension_numbers = #tpu.dot_dimension_numbers<[1], [0], [0], [1], [0, 0, 1, 1], [], []>} : vector<8x128xf32>, vector<128x8xf32>, vector<8x8xf32> -> vector<8x8xf32>
    %c0_21 = arith.constant 0 : index
    %c0_22 = arith.constant 0 : index
    %24 = vector.load %arg9[%c0_21, %c0_22] : memref<1x8xf32, #tpu.memory_space<vmem>>, vector<1x8xf32>
    %25 = vector.broadcast %24 : vector<1x8xf32> to vector<8x8xf32>
    %26 = arith.addf %23, %25 : vector<8x8xf32>
    %cst_23 = arith.constant 0.000000e+00 : f32
    %27 = vector.broadcast %cst_23 : f32 to vector<8x8xf32>
    %28 = arith.maximumf %26, %27 : vector<8x8xf32>
    %29 = tpu.iota {dimensions = array<i32: 1>} : vector<8x8xi32>
    %c3_i32 = arith.constant 3 : i32
    %30 = vector.broadcast %c3_i32 : i32 to vector<8x8xi32>
    %31 = arith.cmpi slt, %29, %30 : vector<8x8xi32>
    %c3_i32_24 = arith.constant 3 : i32
    %32 = vector.broadcast %c3_i32_24 : i32 to vector<8x8xi32>
    %33 = arith.cmpi sge, %29, %32 : vector<8x8xi32>
    %c6_i32 = arith.constant 6 : i32
    %34 = vector.broadcast %c6_i32 : i32 to vector<8x8xi32>
    %35 = arith.cmpi slt, %29, %34 : vector<8x8xi32>
    %36 = arith.andi %33, %35 : vector<8x8xi1>
    %cst_25 = arith.constant -1.000000e+30 : f32
    %37 = vector.broadcast %cst_25 : f32 to vector<8x8xf32>
    %38 = arith.select %31, %28, %37 : vector<8x8xi1>, vector<8x8xf32>
    %cst_26 = arith.constant dense<0xFF800000> : vector<8xf32>
    %39 = vector.multi_reduction <maximumf>, %38, %cst_26 [1] : vector<8x8xf32> to vector<8xf32>
    %40 = vector.shape_cast %39 : vector<8xf32> to vector<8x1xf32>
    %41 = vector.broadcast %40 : vector<8x1xf32> to vector<8x8xf32>
    %42 = arith.subf %28, %41 : vector<8x8xf32>
    %43 = math.exp %42 : vector<8x8xf32>
    %cst_27 = arith.constant 0.000000e+00 : f32
    %44 = vector.broadcast %cst_27 : f32 to vector<8x8xf32>
    %45 = arith.select %31, %43, %44 : vector<8x8xi1>, vector<8x8xf32>
    %cst_28 = arith.constant dense<0.000000e+00> : vector<8xf32>
    %46 = vector.multi_reduction <add>, %45, %cst_28 [1] : vector<8x8xf32> to vector<8xf32>
    %47 = vector.shape_cast %46 : vector<8xf32> to vector<8x1xf32>
    %48 = vector.broadcast %40 : vector<8x1xf32> to vector<8x8xf32>
    %49 = arith.subf %28, %48 : vector<8x8xf32>
    %50 = math.log %47 : vector<8x1xf32>
    %51 = vector.broadcast %50 : vector<8x1xf32> to vector<8x8xf32>
    %52 = arith.subf %49, %51 : vector<8x8xf32>
    %cst_29 = arith.constant -1.000000e+30 : f32
    %53 = vector.broadcast %cst_29 : f32 to vector<8x8xf32>
    %54 = arith.select %36, %28, %53 : vector<8x8xi1>, vector<8x8xf32>
    %cst_30 = arith.constant dense<0xFF800000> : vector<8xf32>
    %55 = vector.multi_reduction <maximumf>, %54, %cst_30 [1] : vector<8x8xf32> to vector<8xf32>
    %56 = vector.shape_cast %55 : vector<8xf32> to vector<8x1xf32>
    %57 = vector.broadcast %56 : vector<8x1xf32> to vector<8x8xf32>
    %58 = arith.subf %28, %57 : vector<8x8xf32>
    %59 = math.exp %58 : vector<8x8xf32>
    %cst_31 = arith.constant 0.000000e+00 : f32
    %60 = vector.broadcast %cst_31 : f32 to vector<8x8xf32>
    %61 = arith.select %36, %59, %60 : vector<8x8xi1>, vector<8x8xf32>
    %cst_32 = arith.constant dense<0.000000e+00> : vector<8xf32>
    %62 = vector.multi_reduction <add>, %61, %cst_32 [1] : vector<8x8xf32> to vector<8xf32>
    %63 = vector.shape_cast %62 : vector<8xf32> to vector<8x1xf32>
    %64 = vector.broadcast %56 : vector<8x1xf32> to vector<8x8xf32>
    %65 = arith.subf %28, %64 : vector<8x8xf32>
    %66 = math.log %63 : vector<8x1xf32>
    %67 = vector.broadcast %66 : vector<8x1xf32> to vector<8x8xf32>
    %68 = arith.subf %65, %67 : vector<8x8xf32>
    %cst_33 = arith.constant 0.000000e+00 : f32
    %69 = vector.broadcast %cst_33 : f32 to vector<8x8xf32>
    %70 = arith.select %36, %68, %69 : vector<8x8xi1>, vector<8x8xf32>
    %71 = arith.select %31, %52, %70 : vector<8x8xi1>, vector<8x8xf32>
    %c0_34 = arith.constant 0 : index
    %c0_35 = arith.constant 0 : index
    %72 = vector.load %arg10[%c0_34, %c0_35] : memref<8x8xf32, #tpu.memory_space<vmem>>, vector<8x8xf32>
    tpu.vector_store %arg10[%c0_34, %c0_35], %71 {strides = array<i32>} : memref<8x8xf32, #tpu.memory_space<vmem>>, vector<8x8xf32>,
    return
  }
  func.func @transform_0(%arg0: i32) -> (i32, i32) {
    %c0_i32 = arith.constant 0 : i32
    %c0_i32_0 = arith.constant 0 : i32
    %c0_i32_1 = arith.constant 0 : i32
    return %c0_i32, %c0_i32_0 : i32, i32
  }
  func.func @transform_1(%arg0: i32) -> (i32, i32) {
    %c0_i32 = arith.constant 0 : i32
    %c0_i32_0 = arith.constant 0 : i32
    %c0_i32_1 = arith.constant 0 : i32
    return %c0_i32, %c0_i32_0 : i32, i32
  }
  func.func @transform_2(%arg0: i32) -> (i32, i32) {
    %c0_i32 = arith.constant 0 : i32
    %c0_i32_0 = arith.constant 0 : i32
    %c0_i32_1 = arith.constant 0 : i32
    return %c0_i32, %c0_i32_0 : i32, i32
  }
  func.func @transform_3(%arg0: i32) -> (i32, i32) {
    %c0_i32 = arith.constant 0 : i32
    %c0_i32_0 = arith.constant 0 : i32
    %c0_i32_1 = arith.constant 0 : i32
    return %c0_i32, %c0_i32_0 : i32, i32
  }
  func.func @transform_4(%arg0: i32) -> (i32, i32) {
    %c0_i32 = arith.constant 0 : i32
    %c0_i32_0 = arith.constant 0 : i32
    %c0_i32_1 = arith.constant 0 : i32
    return %c0_i32, %c0_i32_0 : i32, i32
  }
  func.func @transform_5(%arg0: i32) -> (i32, i32) {
    %c0_i32 = arith.constant 0 : i32
    %c0_i32_0 = arith.constant 0 : i32
    %c0_i32_1 = arith.constant 0 : i32
    return %c0_i32, %c0_i32_0 : i32, i32
  }
  func.func @transform_6(%arg0: i32) -> (i32, i32) {
    %c0_i32 = arith.constant 0 : i32
    %c0_i32_0 = arith.constant 0 : i32
    %c0_i32_1 = arith.constant 0 : i32
    return %c0_i32, %c0_i32_0 : i32, i32
  }
  func.func @transform_7(%arg0: i32) -> (i32, i32) {
    %c0_i32 = arith.constant 0 : i32
    %c0_i32_0 = arith.constant 0 : i32
    %c0_i32_1 = arith.constant 0 : i32
    return %c0_i32, %c0_i32_0 : i32, i32
  }
  func.func @transform_8(%arg0: i32) -> (i32, i32) {
    %c0_i32 = arith.constant 0 : i32
    %c0_i32_0 = arith.constant 0 : i32
    %c0_i32_1 = arith.constant 0 : i32
    return %c0_i32, %c0_i32_0 : i32, i32
  }
  func.func @transform_9(%arg0: i32) -> (i32, i32) {
    %c0_i32 = arith.constant 0 : i32
    %c0_i32_0 = arith.constant 0 : i32
    %c0_i32_1 = arith.constant 0 : i32
    return %c0_i32, %c0_i32_0 : i32, i32
  }
}

</mosaic_0001>

<llo_original>
// kernel: sub.2
$region0: #{sub.2}
  #allocation0 [shape = 's32[1]{0}', space=sflag, size = 0x4, scoped, tag = 'scoped memory for sub.2']
  %s0 = inlined_call_operand.vmem [shape: f32[4,7,9], index: 0, kind: input, shape index: {}]
  %s1 = inlined_call_operand.vmem [shape: f32[4,7,9], index: 1, kind: input, shape index: {}]
  %s2 = inlined_call_operand.vmem [shape: f32[4,7,9], index: 2, kind: output, shape index: {}]
  %v3 = vld [vmem:[%s0] sm:$0xf]
  %v4 = vld [vmem:[%s1] sm:$0xf]
  %5 = xla_tuple %v3, %v4
  %6 = xla_tuple %5
  %v7 = vsub.f32 %v3, %v4
  %8 = xla_tuple %v7
  %9 = vst [vmem:[%s2] sm:$0xf] %v7
  %s10 = scalar_lea.vmem %s0, 4
  %v11 = vld [vmem:[%s10] sm:$0xf]
  %s12 = scalar_lea.vmem %s1, 4
  %v13 = vld [vmem:[%s12] sm:$0xf]
  %14 = xla_tuple %v11, %v13
  %15 = xla_tuple %14
  %v16 = vsub.f32 %v11, %v13
  %17 = xla_tuple %v16
  %s18 = scalar_lea.vmem %s2, 4
  %19 = vst [vmem:[%s18] sm:$0xf] %v16
  %s20 = scalar_lea.vmem %s0, 8
  %v21 = vld [vmem:[%s20] sm:$0xf]
  %s22 = scalar_lea.vmem %s1, 8
  %v23 = vld [vmem:[%s22] sm:$0xf]
  %24 = xla_tuple %v21, %v23
  %25 = xla_tuple %24
  %v26 = vsub.f32 %v21, %v23
  %27 = xla_tuple %v26
  %s28 = scalar_lea.vmem %s2, 8
  %29 = vst [vmem:[%s28] sm:$0xf] %v26
  %s30 = scalar_lea.vmem %s0, 12
  %v31 = vld [vmem:[%s30] sm:$0xf]
  %s32 = scalar_lea.vmem %s1, 12
  %v33 = vld [vmem:[%s32] sm:$0xf]
  %34 = xla_tuple %v31, %v33
  %35 = xla_tuple %34
  %v36 = vsub.f32 %v31, %v33
  %37 = xla_tuple %v36
  %s38 = scalar_lea.vmem %s2, 12
  %39 = vst [vmem:[%s38] sm:$0xf] %v36
  %s40 = scalar_lea.vmem %s0, 16
  %v41 = vld [vmem:[%s40] sm:$0xf]
  %s42 = scalar_lea.vmem %s1, 16
  %v43 = vld [vmem:[%s42] sm:$0xf]
  %44 = xla_tuple %v41, %v43
  %45 = xla_tuple %44
  %v46 = vsub.f32 %v41, %v43
  %47 = xla_tuple %v46
  %s48 = scalar_lea.vmem %s2, 16
  %49 = vst [vmem:[%s48] sm:$0xf] %v46
  %s50 = scalar_lea.vmem %s0, 20
  %v51 = vld [vmem:[%s50] sm:$0xf]
  %s52 = scalar_lea.vmem %s1, 20
  %v53 = vld [vmem:[%s52] sm:$0xf]
  %54 = xla_tuple %v51, %v53
  %55 = xla_tuple %54
  %v56 = vsub.f32 %v51, %v53
  %57 = xla_tuple %v56
  %s58 = scalar_lea.vmem %s2, 20
  %59 = vst [vmem:[%s58] sm:$0xf] %v56
  %s60 = scalar_lea.vmem %s0, 24
  %v61 = vld [vmem:[%s60] sm:$0xf]
  %s62 = scalar_lea.vmem %s1, 24
  %v63 = vld [vmem:[%s62] sm:$0xf]
  %64 = xla_tuple %v61, %v63
  %65 = xla_tuple %64
  %v66 = vsub.f32 %v61, %v63
  %67 = xla_tuple %v66
  %s68 = scalar_lea.vmem %s2, 24
  %69 = vst [vmem:[%s68] sm:$0xf] %v66
  %s70 = scalar_lea.vmem %s0, 28
  %v71 = vld [vmem:[%s70] sm:$0xf]
  %s72 = scalar_lea.vmem %s1, 28
  %v73 = vld [vmem:[%s72] sm:$0xf]
  %74 = xla_tuple %v71, %v73
  %75 = xla_tuple %74
  %v76 = vsub.f32 %v71, %v73
  %77 = xla_tuple %v76
  %s78 = scalar_lea.vmem %s2, 28
  %79 = vst [vmem:[%s78] sm:$0xf] %v76
  %s80 = scalar_lea.vmem %s0, 32
  %v81 = vld [vmem:[%s80] sm:$0xf]
  %s82 = scalar_lea.vmem %s1, 32
  %v83 = vld [vmem:[%s82] sm:$0xf]
  %84 = xla_tuple %v81, %v83
  %85 = xla_tuple %84
  %v86 = vsub.f32 %v81, %v83
  %87 = xla_tuple %v86
  %s88 = scalar_lea.vmem %s2, 32
  %89 = vst [vmem:[%s88] sm:$0xf] %v86

// kernel: sub.3
$region0: #{sub.3}
  #allocation0 [shape = 's32[1]{0}', space=sflag, size = 0x4, scoped, tag = 'scoped memory for sub.3']
  %s0 = inlined_call_operand.vmem [shape: f32[4,7,27], index: 0, kind: input, shape index: {}]
  %s1 = inlined_call_operand.vmem [shape: f32[4,7,27], index: 1, kind: input, shape index: {}]
  %s2 = inlined_call_operand.vmem [shape: f32[4,7,27], index: 2, kind: output, shape index: {}]
  %v3 = vld [vmem:[%s0] sm:$0xf]
  %v4 = vld [vmem:[%s1] sm:$0xf]
  %5 = xla_tuple %v3, %v4
  %6 = xla_tuple %5
  %v7 = vsub.f32 %v3, %v4
  %8 = xla_tuple %v7
  %9 = vst [vmem:[%s2] sm:$0xf] %v7
  %s10 = scalar_lea.vmem %s0, 4
  %v11 = vld [vmem:[%s10] sm:$0xf]
  %s12 = scalar_lea.vmem %s1, 4
  %v13 = vld [vmem:[%s12] sm:$0xf]
  %14 = xla_tuple %v11, %v13
  %15 = xla_tuple %14
  %v16 = vsub.f32 %v11, %v13
  %17 = xla_tuple %v16
  %s18 = scalar_lea.vmem %s2, 4
  %19 = vst [vmem:[%s18] sm:$0xf] %v16
  %s20 = scalar_lea.vmem %s0, 8
  %v21 = vld [vmem:[%s20] sm:$0xf]
  %s22 = scalar_lea.vmem %s1, 8
  %v23 = vld [vmem:[%s22] sm:$0xf]
  %24 = xla_tuple %v21, %v23
  %25 = xla_tuple %24
  %v26 = vsub.f32 %v21, %v23
  %27 = xla_tuple %v26
  %s28 = scalar_lea.vmem %s2, 8
  %29 = vst [vmem:[%s28] sm:$0xf] %v26
  %s30 = scalar_lea.vmem %s0, 12
  %v31 = vld [vmem:[%s30] sm:$0xf]
  %s32 = scalar_lea.vmem %s1, 12
  %v33 = vld [vmem:[%s32] sm:$0xf]
  %34 = xla_tuple %v31, %v33
  %35 = xla_tuple %34
  %v36 = vsub.f32 %v31, %v33
  %37 = xla_tuple %v36
  %s38 = scalar_lea.vmem %s2, 12
  %39 = vst [vmem:[%s38] sm:$0xf] %v36
  %s40 = scalar_lea.vmem %s0, 16
  %v41 = vld [vmem:[%s40] sm:$0xf]
  %s42 = scalar_lea.vmem %s1, 16
  %v43 = vld [vmem:[%s42] sm:$0xf]
  %44 = xla_tuple %v41, %v43
  %45 = xla_tuple %44
  %v46 = vsub.f32 %v41, %v43
  %47 = xla_tuple %v46
  %s48 = scalar_lea.vmem %s2, 16
  %49 = vst [vmem:[%s48] sm:$0xf] %v46
  %s50 = scalar_lea.vmem %s0, 20
  %v51 = vld [vmem:[%s50] sm:$0xf]
  %s52 = scalar_lea.vmem %s1, 20
  %v53 = vld [vmem:[%s52] sm:$0xf]
  %54 = xla_tuple %v51, %v53
  %55 = xla_tuple %54
  %v56 = vsub.f32 %v51, %v53
  %57 = xla_tuple %v56
  %s58 = scalar_lea.vmem %s2, 20
  %59 = vst [vmem:[%s58] sm:$0xf] %v56
  %s60 = scalar_lea.vmem %s0, 24
  %v61 = vld [vmem:[%s60] sm:$0xf]
  %s62 = scalar_lea.vmem %s1, 24
  %v63 = vld [vmem:[%s62] sm:$0xf]
  %64 = xla_tuple %v61, %v63
  %65 = xla_tuple %64
  %v66 = vsub.f32 %v61, %v63
  %67 = xla_tuple %v66
  %s68 = scalar_lea.vmem %s2, 24
  %69 = vst [vmem:[%s68] sm:$0xf] %v66
  %s70 = scalar_lea.vmem %s0, 28
  %v71 = vld [vmem:[%s70] sm:$0xf]
  %s72 = scalar_lea.vmem %s1, 28
  %v73 = vld [vmem:[%s72] sm:$0xf]
  %74 = xla_tuple %v71, %v73
  %75 = xla_tuple %74
  %v76 = vsub.f32 %v71, %v73
  %77 = xla_tuple %v76
  %s78 = scalar_lea.vmem %s2, 28
  %79 = vst [vmem:[%s78] sm:$0xf] %v76
  %s80 = scalar_lea.vmem %s0, 32
  %v81 = vld [vmem:[%s80] sm:$0xf]
  %s82 = scalar_lea.vmem %s1, 32
  %v83 = vld [vmem:[%s82] sm:$0xf]
  %84 = xla_tuple %v81, %v83
  %85 = xla_tuple %84
  %v86 = vsub.f32 %v81, %v83
  %87 = xla_tuple %v86
  %s88 = scalar_lea.vmem %s2, 32
  %89 = vst [vmem:[%s88] sm:$0xf] %v86
  %s90 = scalar_lea.vmem %s0, 36
  %v91 = vld [vmem:[%s90] sm:$0xf]
  %s92 = scalar_lea.vmem %s1, 36
  %v93 = vld [vmem:[%s92] sm:$0xf]
  %94 = xla_tuple %v91, %v93
  %95 = xla_tuple %94
  %v96 = vsub.f32 %v91, %v93
  %97 = xla_tuple %v96
  %s98 = scalar_lea.vmem %s2, 36
  %99 = vst [vmem:[%s98] sm:$0xf] %v96
  %s100 = scalar_lea.vmem %s0, 40
  %v101 = vld [vmem:[%s100] sm:$0xf]
  %s102 = scalar_lea.vmem %s1, 40
  %v103 = vld [vmem:[%s102] sm:$0xf]
  %104 = xla_tuple %v101, %v103
  %105 = xla_tuple %104
  %v106 = vsub.f32 %v101, %v103
  %107 = xla_tuple %v106
  %s108 = scalar_lea.vmem %s2, 40
  %109 = vst [vmem:[%s108] sm:$0xf] %v106
  %s110 = scalar_lea.vmem %s0, 44
  %v111 = vld [vmem:[%s110] sm:$0xf]
  %s112 = scalar_lea.vmem %s1, 44
  %v113 = vld [vmem:[%s112] sm:$0xf]
  %114 = xla_tuple %v111, %v113
  %115 = xla_tuple %114
  %v116 = vsub.f32 %v111, %v113
  %117 = xla_tuple %v116
  %s118 = scalar_lea.vmem %s2, 44
  %119 = vst [vmem:[%s118] sm:$0xf] %v116
  %s120 = scalar_lea.vmem %s0, 48
  %v121 = vld [vmem:[%s120] sm:$0xf]
  %s122 = scalar_lea.vmem %s1, 48
  %v123 = vld [vmem:[%s122] sm:$0xf]
  %124 = xla_tuple %v121, %v123
  %125 = xla_tuple %124
  %v126 = vsub.f32 %v121, %v123
  %127 = xla_tuple %v126
  %s128 = scalar_lea.vmem %s2, 48
  %129 = vst [vmem:[%s128] sm:$0xf] %v126
  %s130 = scalar_lea.vmem %s0, 52
  %v131 = vld [vmem:[%s130] sm:$0xf]
  %s132 = scalar_lea.vmem %s1, 52
  %v133 = vld [vmem:[%s132] sm:$0xf]
  %134 = xla_tuple %v131, %v133
  %135 = xla_tuple %134
  %v136 = vsub.f32 %v131, %v133
  %137 = xla_tuple %v136
  %s138 = scalar_lea.vmem %s2, 52
  %139 = vst [vmem:[%s138] sm:$0xf] %v136
  %s140 = scalar_lea.vmem %s0, 56
  %v141 = vld [vmem:[%s140] sm:$0xf]
  %s142 = scalar_lea.vmem %s1, 56
  %v143 = vld [vmem:[%s142] sm:$0xf]
  %144 = xla_tuple %v141, %v143
  %145 = xla_tuple %144
  %v146 = vsub.f32 %v141, %v143
  %147 = xla_tuple %v146
  %s148 = scalar_lea.vmem %s2, 56
  %149 = vst [vmem:[%s148] sm:$0xf] %v146
  %s150 = scalar_lea.vmem %s0, 60
  %v151 = vld [vmem:[%s150] sm:$0xf]
  %s152 = scalar_lea.vmem %s1, 60
  %v153 = vld [vmem:[%s152] sm:$0xf]
  %154 = xla_tuple %v151, %v153
  %155 = xla_tuple %154
  %v156 = vsub.f32 %v151, %v153
  %157 = xla_tuple %v156
  %s158 = scalar_lea.vmem %s2, 60
  %159 = vst [vmem:[%s158] sm:$0xf] %v156
  %s160 = scalar_lea.vmem %s0, 64
  %v161 = vld [vmem:[%s160] sm:$0xf]
  %s162 = scalar_lea.vmem %s1, 64
  %v163 = vld [vmem:[%s162] sm:$0xf]
  %164 = xla_tuple %v161, %v163
  %165 = xla_tuple %164
  %v166 = vsub.f32 %v161, %v163
  %167 = xla_tuple %v166
  %s168 = scalar_lea.vmem %s2, 64
  %169 = vst [vmem:[%s168] sm:$0xf] %v166
  %s170 = scalar_lea.vmem %s0, 68
  %v171 = vld [vmem:[%s170] sm:$0xf]
  %s172 = scalar_lea.vmem %s1, 68
  %v173 = vld [vmem:[%s172] sm:$0xf]
  %174 = xla_tuple %v171, %v173
  %175 = xla_tuple %174
  %v176 = vsub.f32 %v171, %v173
  %177 = xla_tuple %v176
  %s178 = scalar_lea.vmem %s2, 68
  %179 = vst [vmem:[%s178] sm:$0xf] %v176
  %s180 = scalar_lea.vmem %s0, 72
  %v181 = vld [vmem:[%s180] sm:$0xf]
  %s182 = scalar_lea.vmem %s1, 72
  %v183 = vld [vmem:[%s182] sm:$0xf]
  %184 = xla_tuple %v181, %v183
  %185 = xla_tuple %184
  %v186 = vsub.f32 %v181, %v183
  %187 = xla_tuple %v186
  %s188 = scalar_lea.vmem %s2, 72
  %189 = vst [vmem:[%s188] sm:$0xf] %v186
  %s190 = scalar_lea.vmem %s0, 76
  %v191 = vld [vmem:[%s190] sm:$0xf]
  %s192 = scalar_lea.vmem %s1, 76
  %v193 = vld [vmem:[%s192] sm:$0xf]
  %194 = xla_tuple %v191, %v193
  %195 = xla_tuple %194
  %v196 = vsub.f32 %v191, %v193
  %197 = xla_tuple %v196
  %s198 = scalar_lea.vmem %s2, 76
  %199 = vst [vmem:[%s198] sm:$0xf] %v196
  %s200 = scalar_lea.vmem %s0, 80
  %v201 = vld [vmem:[%s200] sm:$0xf]
  %s202 = scalar_lea.vmem %s1, 80
  %v203 = vld [vmem:[%s202] sm:$0xf]
  %204 = xla_tuple %v201, %v203
  %205 = xla_tuple %204
  %v206 = vsub.f32 %v201, %v203
  %207 = xla_tuple %v206
  %s208 = scalar_lea.vmem %s2, 80
  %209 = vst [vmem:[%s208] sm:$0xf] %v206
  %s210 = scalar_lea.vmem %s0, 84
  %v211 = vld [vmem:[%s210] sm:$0xf]
  %s212 = scalar_lea.vmem %s1, 84
  %v213 = vld [vmem:[%s212] sm:$0xf]
  %214 = xla_tuple %v211, %v213
  %215 = xla_tuple %214
  %v216 = vsub.f32 %v211, %v213
  %217 = xla_tuple %v216
  %s218 = scalar_lea.vmem %s2, 84
  %219 = vst [vmem:[%s218] sm:$0xf] %v216
  %s220 = scalar_lea.vmem %s0, 88
  %v221 = vld [vmem:[%s220] sm:$0xf]
  %s222 = scalar_lea.vmem %s1, 88
  %v223 = vld [vmem:[%s222] sm:$0xf]
  %224 = xla_tuple %v221, %v223
  %225 = xla_tuple %224
  %v226 = vsub.f32 %v221, %v223
  %227 = xla_tuple %v226
  %s228 = scalar_lea.vmem %s2, 88
  %229 = vst [vmem:[%s228] sm:$0xf] %v226
  %s230 = scalar_lea.vmem %s0, 92
  %v231 = vld [vmem:[%s230] sm:$0xf]
  %s232 = scalar_lea.vmem %s1, 92
  %v233 = vld [vmem:[%s232] sm:$0xf]
  %234 = xla_tuple %v231, %v233
  %235 = xla_tuple %234
  %v236 = vsub.f32 %v231, %v233
  %237 = xla_tuple %v236
  %s238 = scalar_lea.vmem %s2, 92
  %239 = vst [vmem:[%s238] sm:$0xf] %v236
  %s240 = scalar_lea.vmem %s0, 96
  %v241 = vld [vmem:[%s240] sm:$0xf]
  %s242 = scalar_lea.vmem %s1, 96
  %v243 = vld [vmem:[%s242] sm:$0xf]
  %244 = xla_tuple %v241, %v243
  %245 = xla_tuple %244
  %v246 = vsub.f32 %v241, %v243
  %247 = xla_tuple %v246
  %s248 = scalar_lea.vmem %s2, 96
  %249 = vst [vmem:[%s248] sm:$0xf] %v246
  %s250 = scalar_lea.vmem %s0, 100
  %v251 = vld [vmem:[%s250] sm:$0xf]
  %s252 = scalar_lea.vmem %s1, 100
  %v253 = vld [vmem:[%s252] sm:$0xf]
  %254 = xla_tuple %v251, %v253
  %255 = xla_tuple %254
  %v256 = vsub.f32 %v251, %v253
  %257 = xla_tuple %v256
  %s258 = scalar_lea.vmem %s2, 100
  %259 = vst [vmem:[%s258] sm:$0xf] %v256
  %s260 = scalar_lea.vmem %s0, 104
  %v261 = vld [vmem:[%s260] sm:$0xf]
  %s262 = scalar_lea.vmem %s1, 104
  %v263 = vld [vmem:[%s262] sm:$0xf]
  %264 = xla_tuple %v261, %v263
  %265 = xla_tuple %264
  %v266 = vsub.f32 %v261, %v263
  %267 = xla_tuple %v266
  %s268 = scalar_lea.vmem %s2, 104
  %269 = vst [vmem:[%s268] sm:$0xf] %v266

// kernel: net_multitask_forward.2
$region0: #{net_multitask_forward.2}
  #allocation0 [shape = 'u32[]', space=smem, size = 0x4, offset = 0x4, fixed_abs, tag = 'smem constant byte address 0x4 - core index']
  #allocation1 [shape = 'u32[72,128]{1,0:T(1,128)}', space=vmem, size = 0x9000, scoped, tag = 'internal scratch']
  %s0 = inlined_call_operand.vmem [shape: f32[32,120], index: 0, kind: input, shape index: {}]
  %s1 = inlined_call_operand.hbm [shape: f32[120,128], index: 1, kind: input, shape index: {}]
  %s2 = inlined_call_operand.vmem [shape: f32[1,128], index: 2, kind: input, shape index: {}]
  %s3 = inlined_call_operand.vmem [shape: f32[128,8], index: 3, kind: input, shape index: {}]
  %s4 = inlined_call_operand.vmem [shape: f32[1,8], index: 4, kind: input, shape index: {}]
  %s5 = inlined_call_operand.vmem [shape: f32[32,8], index: 5, kind: output, shape index: {}]
  %s6 = sld [smem:[#allocation0]]
  $region57: #{net_multitask_forward.2} parent=0
    _
  %s8 = ssub.s32 1, %s6
  %s9 = scalar_select 0, %s8, %s6
  $region1: #{net_multitask_forward.2} parent=0
    #allocation2 [shape = 'u8[61440]{0}', space=vmem, size = 0xf000, scoped, tag = 'input window, operand 1, single buffered']
    #allocation3 [shape = 's32[2]{0}', space=sflag, size = 0x8, scoped, tag = 'scoped memory for net_multitask_forward.2']
    %10 = vsyncpa [#allocation3], 0
    loop: start=0, step=1, limit=4
    $region2: #{net_multitask_forward.2} parent=1 // loop_pre_header
      _
    $region3: #{net_multitask_forward.2} parent=1 // loop_header
      %s12 = sphi 0, %s16
      %p13 = scmp.ge.s32.totalorder %s12, 4
      %s22 = sphi 0, %s24
      %s25 = sphi 0, %s22
      %s26 = sphi 0, %s25
      %s42 = sphi 0, %s26
      %s46 = sphi 0, %s46
      %s48 = sphi 0, %s46
      %s49 = sphi 0, %s48
      %s63 = sphi 0, %s49
      %s67 = sphi 0, %s67
      %s69 = sphi 0, %s67
      %s70 = sphi 0, %s69
      %s84 = sphi 0, %s70
      %s88 = sphi 0, %s88
      %s90 = sphi 0, %s88
      %s91 = sphi 0, %s90
      %s105 = sphi 0, %s91
      %s109 = sphi 0, %s109
      %s111 = sphi 0, %s109
      %s112 = sphi 0, %s111
      %s126 = sphi 0, %s112
      %s132 = sphi 0, %s134
      %s135 = sphi 0, %s132
      %s136 = sphi 0, %s135
      %s152 = sphi 0, %s136
    $region4: #{net_multitask_forward.2} parent=1 // loop_header_branch
      %15 = sbr.rel (%p13) target = $region8
    $region5: #{net_multitask_forward.2} parent=1 // loop_body
      %s17 = ssub.s32 %s12, 1
      %s18 = ssub.s32 %s12, 2
      %s19 = sadd.s32 %s12, 1
      %s20 = ssub.s32 %s12, %s19
      %p21 = scmp.eq.s32.totalorder %s20, 0
      %s23 = sadd.s32 %s22, 1
      %s24 = scalar_select %p21, %s22, %s23
      %p27 = pneg %p21
      %p28 = scmp.eq.s32.totalorder %s12, 1
      %p29 = por %p27, %p28
      %p30 = scmp.ne.s32.totalorder %s22, %s25
      %p31 = scmp.eq.s32.totalorder %s12, 0
      %p32 = por %p30, %p31
      %p33 = scmp.ne.s32.totalorder %s22, %s25
      %p34 = scmp.eq.s32.totalorder %s17, 1
      %p35 = por %p33, %p34
      %p36 = scmp.ne.s32.totalorder %s25, %s26
      %p37 = scmp.eq.s32.totalorder %s17, 0
      %p38 = por %p36, %p37
      %p39 = scmp.ne.s32.totalorder %s25, %s26
      %p40 = scmp.eq.s32.totalorder %s18, 1
      %p41 = por %p39, %p40
      %p43 = scmp.ne.s32.totalorder %s26, %s42
      %p44 = scmp.eq.s32.totalorder %s18, 0
      %p45 = por %p43, %p44
      %s47 = sadd.s32 %s46, 1
      %p50 = scmp.eq.s32.totalorder %s12, 1
      %p51 = scmp.ne.s32.totalorder %s46, %s48
      %p52 = scmp.eq.s32.totalorder %s12, 0
      %p53 = por %p51, %p52
      %p54 = scmp.ne.s32.totalorder %s46, %s48
      %p55 = scmp.eq.s32.totalorder %s17, 1
      %p56 = por %p54, %p55
      %p57 = scmp.ne.s32.totalorder %s48, %s49
      %p58 = scmp.eq.s32.totalorder %s17, 0
      %p59 = por %p57, %p58
      %p60 = scmp.ne.s32.totalorder %s48, %s49
      %p61 = scmp.eq.s32.totalorder %s18, 1
      %p62 = por %p60, %p61
      %p64 = scmp.ne.s32.totalorder %s49, %s63
      %p65 = scmp.eq.s32.totalorder %s18, 0
      %p66 = por %p64, %p65
      %s68 = sadd.s32 %s67, 1
      %p71 = scmp.eq.s32.totalorder %s12, 1
      %p72 = scmp.ne.s32.totalorder %s67, %s69
      %p73 = scmp.eq.s32.totalorder %s12, 0
      %p74 = por %p72, %p73
      %p75 = scmp.ne.s32.totalorder %s67, %s69
      %p76 = scmp.eq.s32.totalorder %s17, 1
      %p77 = por %p75, %p76
      %p78 = scmp.ne.s32.totalorder %s69, %s70
      %p79 = scmp.eq.s32.totalorder %s17, 0
      %p80 = por %p78, %p79
      %p81 = scmp.ne.s32.totalorder %s69, %s70
      %p82 = scmp.eq.s32.totalorder %s18, 1
      %p83 = por %p81, %p82
      %p85 = scmp.ne.s32.totalorder %s70, %s84
      %p86 = scmp.eq.s32.totalorder %s18, 0
      %p87 = por %p85, %p86
      %s89 = sadd.s32 %s88, 1
      %p92 = scmp.eq.s32.totalorder %s12, 1
      %p93 = scmp.ne.s32.totalorder %s88, %s90
      %p94 = scmp.eq.s32.totalorder %s12, 0
      %p95 = por %p93, %p94
      %p96 = scmp.ne.s32.totalorder %s88, %s90
      %p97 = scmp.eq.s32.totalorder %s17, 1
      %p98 = por %p96, %p97
      %p99 = scmp.ne.s32.totalorder %s90, %s91
      %p100 = scmp.eq.s32.totalorder %s17, 0
      %p101 = por %p99, %p100
      %p102 = scmp.ne.s32.totalorder %s90, %s91
      %p103 = scmp.eq.s32.totalorder %s18, 1
      %p104 = por %p102, %p103
      %p106 = scmp.ne.s32.totalorder %s91, %s105
      %p107 = scmp.eq.s32.totalorder %s18, 0
      %p108 = por %p106, %p107
      %s110 = sadd.s32 %s109, 1
      %p113 = scmp.eq.s32.totalorder %s12, 1
      %p114 = scmp.ne.s32.totalorder %s109, %s111
      %p115 = scmp.eq.s32.totalorder %s12, 0
      %p116 = por %p114, %p115
      %p117 = scmp.ne.s32.totalorder %s109, %s111
      %p118 = scmp.eq.s32.totalorder %s17, 1
      %p119 = por %p117, %p118
      %p120 = scmp.ne.s32.totalorder %s111, %s112
      %p121 = scmp.eq.s32.totalorder %s17, 0
      %p122 = por %p120, %p121
      %p123 = scmp.ne.s32.totalorder %s111, %s112
      %p124 = scmp.eq.s32.totalorder %s18, 1
      %p125 = por %p123, %p124
      %p127 = scmp.ne.s32.totalorder %s112, %s126
      %p128 = scmp.eq.s32.totalorder %s18, 0
      %p129 = por %p127, %p128
      %s130 = ssub.s32 %s12, %s19
      %p131 = scmp.eq.s32.totalorder %s130, 0
      %s133 = sadd.s32 %s132, 1
      %s134 = scalar_select %p131, %s132, %s133
      %p137 = pneg %p131
      %p138 = scmp.eq.s32.totalorder %s12, 1
      %p139 = por %p137, %p138
      %p140 = scmp.ne.s32.totalorder %s132, %s135
      %p141 = scmp.eq.s32.totalorder %s12, 0
      %p142 = por %p140, %p141
      %p143 = scmp.ne.s32.totalorder %s132, %s135
      %p144 = scmp.eq.s32.totalorder %s17, 1
      %p145 = por %p143, %p144
      %p146 = scmp.ne.s32.totalorder %s135, %s136
      %p147 = scmp.eq.s32.totalorder %s17, 0
      %p148 = por %p146, %p147
      %p149 = scmp.ne.s32.totalorder %s135, %s136
      %p150 = scmp.eq.s32.totalorder %s18, 1
      %p151 = por %p149, %p150
      %p153 = scmp.ne.s32.totalorder %s136, %s152
      %p154 = scmp.eq.s32.totalorder %s18, 0
      %p155 = por %p153, %p154
      %p156 = scmp.le.s32.totalorder 1, %s12
      %p157 = scmp.lt.s32.totalorder %s12, 3
      %p158 = pnand %p156, %p157
      %p159 = pneg %p158
      // Predicated region
      $region9: #{net_multitask_forward.2} parent=5 // pred_check
        _
      $region10: #{net_multitask_forward.2} parent=5 // pred_check_branch
        %161 = sbr.rel (%p158) target = $region12
      $region11: #{net_multitask_forward.2} parent=5 // pred_region
        %s162 = ssub.s32 %s12, 1
        // Predicated region
        $region13: #{net_multitask_forward.2} parent=11 // pred_check
          %p163 = pneg %p59
        $region14: #{net_multitask_forward.2} parent=11 // pred_check_branch
          %165 = sbr.rel (%p163) target = $region16
        $region15: #{net_multitask_forward.2} parent=11 // pred_region
          %167 = vsyncadd [#allocation3], 0
          %s168 = sshll.u32 %s1, 4
          %s169 = int_to_ptr.hbm [resolvable:$true] %s168
          %s170 = sshll.u32 [#allocation2], 4
          %s171 = int_to_ptr.vmem [resolvable:$true] %s170
          %176 = dma.hbm_to_vmem [thread:$0]  %s169, 1920, %s171, [#allocation3], 128, 128, 8
        $region16: #{net_multitask_forward.2} parent=11 // pred_fallthru
          _
        // Predicated region
        $region17: #{net_multitask_forward.2} parent=11 // pred_check
          %p177 = pneg %p80
        $region18: #{net_multitask_forward.2} parent=11 // pred_check_branch
          %179 = sbr.rel (%p177) target = $region20
        $region19: #{net_multitask_forward.2} parent=11 // pred_region
          _
        $region20: #{net_multitask_forward.2} parent=11 // pred_fallthru
          _
        // Predicated region
        $region21: #{net_multitask_forward.2} parent=11 // pred_check
          %p180 = pneg %p101
        $region22: #{net_multitask_forward.2} parent=11 // pred_check_branch
          %182 = sbr.rel (%p180) target = $region24
        $region23: #{net_multitask_forward.2} parent=11 // pred_region
          _
        $region24: #{net_multitask_forward.2} parent=11 // pred_fallthru
          _
        // Predicated region
        $region25: #{net_multitask_forward.2} parent=11 // pred_check
          %p183 = pneg %p122
        $region26: #{net_multitask_forward.2} parent=11 // pred_check_branch
          %185 = sbr.rel (%p183) target = $region28
        $region27: #{net_multitask_forward.2} parent=11 // pred_region
          _
        $region28: #{net_multitask_forward.2} parent=11 // pred_fallthru
          _
      $region12: #{net_multitask_forward.2} parent=5 // pred_fallthru
        _
      %p186 = scmp.lt.s32.totalorder %s12, 2
      // Predicated region
      $region29: #{net_multitask_forward.2} parent=5 // pred_check
        %p187 = pneg %p186
      $region30: #{net_multitask_forward.2} parent=5 // pred_check_branch
        %189 = sbr.rel (%p187) target = $region32
      $region31: #{net_multitask_forward.2} parent=5 // pred_region
        // Predicated region
        $region33: #{net_multitask_forward.2} parent=31 // pred_check
          %p190 = pneg %p32
        $region34: #{net_multitask_forward.2} parent=31 // pred_check_branch
          %192 = sbr.rel (%p190) target = $region36
        $region35: #{net_multitask_forward.2} parent=31 // pred_region
          %s193 = smul.u32 2, %s12
          %p194 = scmp.lt.s32.totalorder %s193, 3
          %s195 = scalar_select %p194, %s193, 3
          %s196 = smul.addr %s195, 8
          %s197 = scalar_lea.vmem %s0, %s196
          %s198 = smul.u32 2, %s12
        $region36: #{net_multitask_forward.2} parent=31 // pred_fallthru
          _
      $region32: #{net_multitask_forward.2} parent=5 // pred_fallthru
        _
      %p199 = scmp.le.s32.totalorder 1, %s12
      %p200 = scmp.lt.s32.totalorder %s12, 3
      %p201 = pnand %p199, %p200
      %p202 = pneg %p201
      // Predicated region
      $region37: #{net_multitask_forward.2} parent=5 // pred_check
        _
      $region38: #{net_multitask_forward.2} parent=5 // pred_check_branch
        %204 = sbr.rel (%p201) target = $region40
      $region39: #{net_multitask_forward.2} parent=5 // pred_region
        %s205 = ssub.s32 %s12, 1
        // Predicated region
        $region41: #{net_multitask_forward.2} parent=39 // pred_check
          %p206 = pneg %p59
        $region42: #{net_multitask_forward.2} parent=39 // pred_check_branch
          %208 = sbr.rel (%p206) target = $region44
        $region43: #{net_multitask_forward.2} parent=39 // pred_region
          %210 = dma.done [#allocation3], 1920
        $region44: #{net_multitask_forward.2} parent=39 // pred_fallthru
          _
        %s211 = smul.u32 2, %s17
        %p212 = scmp.lt.s32.totalorder %s211, 3
        %s213 = scalar_select %p212, %s211, 3
        %s214 = smul.addr %s213, 8
        %s215 = scalar_lea.vmem %s0, %s214
        %p216 = pneg %p38
        %p217 = pneg %p35
        %p218 = pneg %p59
        %p219 = pneg %p56
        %p220 = pneg %p80
        %p221 = pneg %p77
        %p222 = pneg %p101
        %p223 = pneg %p98
        %p224 = pneg %p122
        %p225 = pneg %p119
        %p226 = pneg %p148
        %p227 = pneg %p145
        %s228 = smul.u32 2, %s17
        %p229 = scmp.lt.s32.totalorder %s228, 3
        %s230 = scalar_select %p229, %s228, 3
        %s231 = smul.addr %s230, 8
        %s232 = scalar_lea.vmem %s5, %s231
        %s233 = smul.u32 2, %s17
        %p234 = scmp.lt.s32.totalorder %s233, 3
        %s235 = scalar_select %p234, %s233, 3
        %s236 = smul.addr %s235, 8
        %s237 = scalar_lea.vmem %s0, %s236
        %s238 = smul.u32 2, %s17
        %s239 = smul.u32 2, %s17
        %p240 = scmp.lt.s32.totalorder %s239, 3
        %s241 = scalar_select %p240, %s239, 3
        %s242 = smul.addr %s241, 8
        %s243 = scalar_lea.vmem %s5, %s242
        %s244 = smul.u32 2, %s17
        %v245 = vld [vmem:[%s237] sm:$0xff]
        %v246 = vld [vmem:[%s237 + $0x8] sm:$0xff]
        %vm247 = vcmp.ne.f32.partialorder %v245, %v245
        %vm248 = vcmp.ne.f32.partialorder %v246, %v246
        %v249 = vsel %vm247, 0.0, %v245
        %v250 = vsel %vm248, 0.0, %v246
        %v251 = vld [vmem:[#allocation2] sm:$0xff]
        %v252 = vld [vmem:[#allocation2 + $0x8] sm:$0xff]
        %v253 = vld [vmem:[#allocation2 + $0x10] sm:$0xff]
        %v254 = vld [vmem:[#allocation2 + $0x18] sm:$0xff]
        %v255 = vld [vmem:[#allocation2 + $0x20] sm:$0xff]
        %v256 = vld [vmem:[#allocation2 + $0x28] sm:$0xff]
        %v257 = vld [vmem:[#allocation2 + $0x30] sm:$0xff]
        %v258 = vld [vmem:[#allocation2 + $0x38] sm:$0xff]
        %v259 = vld [vmem:[#allocation2 + $0x40] sm:$0xff]
        %v260 = vld [vmem:[#allocation2 + $0x48] sm:$0xff]
        %v261 = vld [vmem:[#allocation2 + $0x50] sm:$0xff]
        %v262 = vld [vmem:[#allocation2 + $0x58] sm:$0xff]
        %v263 = vld [vmem:[#allocation2 + $0x60] sm:$0xff]
        %v264 = vld [vmem:[#allocation2 + $0x68] sm:$0xff]
        %v265 = vld [vmem:[#allocation2 + $0x70] sm:$0xff]
        %v266 = vld [vmem:[%s2] sm:$0x1]
        %v268 = vperm.slane %v266, 0
        %vm270 = vcmask 982016
        %v272 = vsel %vm270, %v249, 0
        %v275 = vsel %vm270, %v250, 0
        %277 = vmatpush.msra.mxu0 0.0
        %278 = vmatpush.msra.mxu0 %v265
        %279 = vmatpush.msra.mxu0 %v264
        %280 = vmatpush.msra.mxu0 %v263
        %281 = vmatpush.msra.mxu0 %v262
        %282 = vmatpush.msra.mxu0 %v261
        %283 = vmatpush.msra.mxu0 %v260
        %284 = vmatpush.msra.mxu0 %v259
        %285 = vmatpush.msra.mxu0 %v258
        %286 = vmatpush.msra.mxu0 %v257
        %287 = vmatpush.msra.mxu0 %v256
        %288 = vmatpush.msra.mxu0 %v255
        %289 = vmatpush.msra.mxu0 %v254
        %290 = vmatpush.msra.mxu0 %v253
        %291 = vmatpush.msra.mxu0 %v252
        %292 = vmatpush.msra.mxu0 %v251
        %293 = vmatmul.f32.gmra.mxu0 %v272
        %v294 = vpop.f32.mrf.mxu0
        %v295 = vadd.f32 %v268, %v294
        %296 = vmatmul.f32.gmra.mxu0 %v275
        %v297 = vpop.f32.mrf.mxu0
        %v298 = vadd.f32 %v268, %v297
        %299 = vdwg.mxu0
        %v300 = vmax.f32 %v295, 0.0
        %v301 = vmax.f32 %v298, 0.0
        %v302 = vld [vmem:[%s3] sm:$0xff]
        %v303 = vld [vmem:[%s3 + $0x8] sm:$0xff]
        %v304 = vld [vmem:[%s3 + $0x10] sm:$0xff]
        %v305 = vld [vmem:[%s3 + $0x18] sm:$0xff]
        %v306 = vld [vmem:[%s3 + $0x20] sm:$0xff]
        %v307 = vld [vmem:[%s3 + $0x28] sm:$0xff]
        %v308 = vld [vmem:[%s3 + $0x30] sm:$0xff]
        %v309 = vld [vmem:[%s3 + $0x38] sm:$0xff]
        %v310 = vld [vmem:[%s3 + $0x40] sm:$0xff]
        %v311 = vld [vmem:[%s3 + $0x48] sm:$0xff]
        %v312 = vld [vmem:[%s3 + $0x50] sm:$0xff]
        %v313 = vld [vmem:[%s3 + $0x58] sm:$0xff]
        %v314 = vld [vmem:[%s3 + $0x60] sm:$0xff]
        %v315 = vld [vmem:[%s3 + $0x68] sm:$0xff]
        %v316 = vld [vmem:[%s3 + $0x70] sm:$0xff]
        %v317 = vld [vmem:[%s3 + $0x78] sm:$0xff]
        %v318 = vld [vmem:[%s4] sm:$0x1]
        %v320 = vperm.slane %v318, 0
        %322 = vmatpush.msra.mxu0 %v317
        %323 = vmatpush.msra.mxu0 %v316
        %324 = vmatpush.msra.mxu0 %v315
        %325 = vmatpush.msra.mxu0 %v314
        %326 = vmatpush.msra.mxu0 %v313
        %327 = vmatpush.msra.mxu0 %v312
        %328 = vmatpush.msra.mxu0 %v311
        %329 = vmatpush.msra.mxu0 %v310
        %330 = vmatpush.msra.mxu0 %v309
        %331 = vmatpush.msra.mxu0 %v308
        %332 = vmatpush.msra.mxu0 %v307
        %333 = vmatpush.msra.mxu0 %v306
        %334 = vmatpush.msra.mxu0 %v305
        %335 = vmatpush.msra.mxu0 %v304
        %336 = vmatpush.msra.mxu0 %v303
        %337 = vmatpush.msra.mxu0 %v302
        %338 = vmatmul.f32.gmra.mxu0 %v300
        %v339 = vpop.f32.mrf.mxu0
        %v340 = vadd.f32 %v320, %v339
        %341 = vmatmul.f32.gmra.mxu0 %v301
        %v342 = vpop.f32.mrf.mxu0
        %v343 = vadd.f32 %v320, %v342
        %344 = vdwg.mxu0
        %v345 = vmax.f32 %v340, 0.0
        %v346 = vmax.f32 %v343, 0.0
        %vm347 = vcmask 64512
        %348 = vst.msk [vmem:[%s243] sm:$0xff] %vm347, %v345
        %349 = vst.msk [vmem:[%s243 + $0x8] sm:$0xff] %vm347, %v346
        %s350 = smul.u32 2, %s17
        %p351 = scmp.lt.s32.totalorder %s350, 3
        %s352 = scalar_select %p351, %s350, 3
        %s353 = smul.addr %s352, 8
        %s354 = scalar_lea.vmem %s5, %s353
        // Predicated region
        $region45: #{net_multitask_forward.2} parent=39 // pred_check
          %p355 = pneg %p145
        $region46: #{net_multitask_forward.2} parent=39 // pred_check_branch
          %357 = sbr.rel (%p355) target = $region48
        $region47: #{net_multitask_forward.2} parent=39 // pred_region
          %s358 = smul.u32 2, %s17
        $region48: #{net_multitask_forward.2} parent=39 // pred_fallthru
          _
      $region40: #{net_multitask_forward.2} parent=5 // pred_fallthru
        _
      %p359 = scmp.le.s32.totalorder 2, %s12
      // Predicated region
      $region49: #{net_multitask_forward.2} parent=5 // pred_check
        %p360 = pneg %p359
      $region50: #{net_multitask_forward.2} parent=5 // pred_check_branch
        %362 = sbr.rel (%p360) target = $region52
      $region51: #{net_multitask_forward.2} parent=5 // pred_region
        %s363 = ssub.s32 %s12, 2
        // Predicated region
        $region53: #{net_multitask_forward.2} parent=51 // pred_check
          %p364 = pneg %p151
        $region54: #{net_multitask_forward.2} parent=51 // pred_check_branch
          %366 = sbr.rel (%p364) target = $region56
        $region55: #{net_multitask_forward.2} parent=51 // pred_region
          %s367 = smul.u32 2, %s18
          %p368 = scmp.lt.s32.totalorder %s367, 3
          %s369 = scalar_select %p368, %s367, 3
          %s370 = smul.addr %s369, 8
          %s371 = scalar_lea.vmem %s5, %s370
        $region56: #{net_multitask_forward.2} parent=51 // pred_fallthru
          _
      $region52: #{net_multitask_forward.2} parent=5 // pred_fallthru
        _
    $region6: #{net_multitask_forward.2} parent=1 // loop_footer
      %s16 = sadd.s32 1, %s12
    $region7: #{net_multitask_forward.2} parent=1 // loop_footer_branch
      %11 = sbr.rel target = $region3
    $region8: #{net_multitask_forward.2} parent=1 // loop_exit
      _
    %372 = vsyncpa [#allocation3], 1
    %s373 = scalar_lea.sflag [#allocation3], 1
    %374 = vsyncpa %s373, 1

// kernel: squeeze.8
$region0: #{squeeze.8}
  %s0 = inlined_call_operand.vmem [shape: f32[4,3,27], index: 0, kind: input, shape index: {}]
  %s1 = inlined_call_operand.vmem [shape: f32[4,81], index: 1, kind: output, shape index: {}]
  $region1: #{squeeze.8} parent=0
    #allocation0 [shape = 'u8[4096]{0}', space=vmem, size = 0x1000, scoped, tag = 'scoped mem for output reshape']
    #allocation1 [shape = 'u8[16384]{0}', space=vmem, size = 0x4000, scoped, tag = 'scoped mem for input reshape']
    %s3 = ssub.s32 16, 1
    %s4 = scalar_lea.vmem %s0, 12
    %v5 = vld [vmem:[%s4] sm:%s3]
    %s6 = scalar_lea.vmem [#allocation1], 24
    %7 = vst [vmem:[%s6] sm:%s3] %v5
    %s8 = scalar_lea.vmem %s0, 8
    %v9 = vld [vmem:[%s8] sm:%s3]
    %s10 = scalar_lea.vmem [#allocation1], 16
    %11 = vst [vmem:[%s10] sm:%s3] %v9
    %s12 = scalar_lea.vmem %s0, 4
    %v13 = vld [vmem:[%s12] sm:%s3]
    %s14 = scalar_lea.vmem [#allocation1], 8
    %15 = vst [vmem:[%s14] sm:%s3] %v13
    %v16 = vld [vmem:[%s0] sm:%s3]
    %17 = vst [vmem:[#allocation1] sm:%s3] %v16
    %v18 = vld [vmem:[#allocation1] ss:$8 sm:$0xf]
    %vm19 = vcmask 220160
    %20 = vst.msk [vmem:[#allocation0] sm:$0xf] %vm19, %v18
    %s21 = scalar_lea.vmem [#allocation1], 2
    %v22 = vld [vmem:[%s21] ss:$8 sm:$0xf]
    %23 = vrot.lane.b32.xlu0 %v22, 54
    %v24 = vpop.permute.xlu0 %23
    %vm25 = vcmask 662960
    %26 = vst.msk [vmem:[#allocation0] sm:$0xf] %vm25, %v24
    %s27 = scalar_lea.vmem [#allocation1], 1
    %v28 = vld [vmem:[%s27] ss:$8 sm:$0xf]
    %29 = vrot.lane.b32.xlu0 %v28, 27
    %v30 = vpop.permute.xlu0 %29
    %vm31 = vcmask 441560
    %32 = vst.msk [vmem:[#allocation0] sm:$0xf] %vm31, %v30
    %s34 = ssub.s32 16, 1
    %v35 = vld [vmem:[#allocation0] sm:%s34]
    %s37 = ssub.s32 16, 1
    %38 = vst [vmem:[%s1] sm:%s37] %v35

// kernel: net_multitask_forward.3
$region0: #{net_multitask_forward.3}
  #allocation0 [shape = 'u32[]', space=smem, size = 0x4, offset = 0x4, fixed_abs, tag = 'smem constant byte address 0x4 - core index']
  #allocation1 [shape = 'u32[72,128]{1,0:T(1,128)}', space=vmem, size = 0x9000, scoped, tag = 'internal scratch']
  %s0 = inlined_call_operand.vmem [shape: f32[8,120], index: 0, kind: input, shape index: {}]
  %s1 = inlined_call_operand.vmem [shape: f32[120,128], index: 1, kind: input, shape index: {}]
  %s2 = inlined_call_operand.vmem [shape: f32[1,128], index: 2, kind: input, shape index: {}]
  %s3 = inlined_call_operand.vmem [shape: f32[128,8], index: 3, kind: input, shape index: {}]
  %s4 = inlined_call_operand.vmem [shape: f32[1,8], index: 4, kind: input, shape index: {}]
  %s5 = inlined_call_operand.vmem [shape: f32[8,128], index: 5, kind: input, shape index: {}]
  %s6 = inlined_call_operand.vmem [shape: f32[1,128], index: 6, kind: input, shape index: {}]
  %s7 = inlined_call_operand.vmem [shape: f32[128,8], index: 7, kind: input, shape index: {}]
  %s8 = inlined_call_operand.vmem [shape: f32[1,8], index: 8, kind: input, shape index: {}]
  %s9 = inlined_call_operand.vmem [shape: f32[8,8], index: 9, kind: output, shape index: {}]
  %s10 = sld [smem:[#allocation0]]
  $region46: #{net_multitask_forward.3} parent=0
    _
  %s12 = ssub.s32 1, %s10
  %s13 = scalar_select 0, %s12, %s10
  // Predicated region
  $region2: #{net_multitask_forward.3} parent=0 // pred_check
    _
  $region3: #{net_multitask_forward.3} parent=0 // pred_check_branch
    %15 = sbr.rel (0) target = $region5
  $region4: #{net_multitask_forward.3} parent=0 // pred_region
    _
  $region5: #{net_multitask_forward.3} parent=0 // pred_fallthru
    _
  // Predicated region
  $region6: #{net_multitask_forward.3} parent=0 // pred_check
    _
  $region7: #{net_multitask_forward.3} parent=0 // pred_check_branch
    %17 = sbr.rel (0) target = $region9
  $region8: #{net_multitask_forward.3} parent=0 // pred_region
    _
  $region9: #{net_multitask_forward.3} parent=0 // pred_fallthru
    _
  // Predicated region
  $region10: #{net_multitask_forward.3} parent=0 // pred_check
    _
  $region11: #{net_multitask_forward.3} parent=0 // pred_check_branch
    %19 = sbr.rel (0) target = $region13
  $region12: #{net_multitask_forward.3} parent=0 // pred_region
    _
  $region13: #{net_multitask_forward.3} parent=0 // pred_fallthru
    _
  // Predicated region
  $region14: #{net_multitask_forward.3} parent=0 // pred_check
    _
  $region15: #{net_multitask_forward.3} parent=0 // pred_check_branch
    %21 = sbr.rel (0) target = $region17
  $region16: #{net_multitask_forward.3} parent=0 // pred_region
    _
  $region17: #{net_multitask_forward.3} parent=0 // pred_fallthru
    _
  // Predicated region
  $region18: #{net_multitask_forward.3} parent=0 // pred_check
    _
  $region19: #{net_multitask_forward.3} parent=0 // pred_check_branch
    %23 = sbr.rel (0) target = $region21
  $region20: #{net_multitask_forward.3} parent=0 // pred_region
    _
  $region21: #{net_multitask_forward.3} parent=0 // pred_fallthru
    _
  // Predicated region
  $region22: #{net_multitask_forward.3} parent=0 // pred_check
    _
  $region23: #{net_multitask_forward.3} parent=0 // pred_check_branch
    %25 = sbr.rel (0) target = $region25
  $region24: #{net_multitask_forward.3} parent=0 // pred_region
    _
  $region25: #{net_multitask_forward.3} parent=0 // pred_fallthru
    _
  // Predicated region
  $region26: #{net_multitask_forward.3} parent=0 // pred_check
    _
  $region27: #{net_multitask_forward.3} parent=0 // pred_check_branch
    %27 = sbr.rel (0) target = $region29
  $region28: #{net_multitask_forward.3} parent=0 // pred_region
    _
  $region29: #{net_multitask_forward.3} parent=0 // pred_fallthru
    _
  // Predicated region
  $region30: #{net_multitask_forward.3} parent=0 // pred_check
    _
  $region31: #{net_multitask_forward.3} parent=0 // pred_check_branch
    %29 = sbr.rel (0) target = $region33
  $region32: #{net_multitask_forward.3} parent=0 // pred_region
    _
  $region33: #{net_multitask_forward.3} parent=0 // pred_fallthru
    _
  // Predicated region
  $region34: #{net_multitask_forward.3} parent=0 // pred_check
    _
  $region35: #{net_multitask_forward.3} parent=0 // pred_check_branch
    %31 = sbr.rel (0) target = $region37
  $region36: #{net_multitask_forward.3} parent=0 // pred_region
    _
  $region37: #{net_multitask_forward.3} parent=0 // pred_fallthru
    _
  %v32 = vld [vmem:[%s0] sm:$0xff]
  %v33 = vld [vmem:[%s1] sm:$0xff]
  %v34 = vld [vmem:[%s1 + $0x8] sm:$0xff]
  %v35 = vld [vmem:[%s1 + $0x10] sm:$0xff]
  %v36 = vld [vmem:[%s1 + $0x18] sm:$0xff]
  %v37 = vld [vmem:[%s1 + $0x20] sm:$0xff]
  %v38 = vld [vmem:[%s1 + $0x28] sm:$0xff]
  %v39 = vld [vmem:[%s1 + $0x30] sm:$0xff]
  %v40 = vld [vmem:[%s1 + $0x38] sm:$0xff]
  %v41 = vld [vmem:[%s1 + $0x40] sm:$0xff]
  %v42 = vld [vmem:[%s1 + $0x48] sm:$0xff]
  %v43 = vld [vmem:[%s1 + $0x50] sm:$0xff]
  %v44 = vld [vmem:[%s1 + $0x58] sm:$0xff]
  %v45 = vld [vmem:[%s1 + $0x60] sm:$0xff]
  %v46 = vld [vmem:[%s1 + $0x68] sm:$0xff]
  %v47 = vld [vmem:[%s1 + $0x70] sm:$0xff]
  %v48 = vld [vmem:[%s2] sm:$0x1]
  %v50 = vperm.slane %v48, 0
  %vm52 = vcmask 982016
  %v54 = vsel %vm52, %v32, 0
  %56 = vmatpush.msra.mxu0 0.0
  %57 = vmatpush.msra.mxu0 %v47
  %58 = vmatpush.msra.mxu0 %v46
  %59 = vmatpush.msra.mxu0 %v45
  %60 = vmatpush.msra.mxu0 %v44
  %61 = vmatpush.msra.mxu0 %v43
  %62 = vmatpush.msra.mxu0 %v42
  %63 = vmatpush.msra.mxu0 %v41
  %64 = vmatpush.msra.mxu0 %v40
  %65 = vmatpush.msra.mxu0 %v39
  %66 = vmatpush.msra.mxu0 %v38
  %67 = vmatpush.msra.mxu0 %v37
  %68 = vmatpush.msra.mxu0 %v36
  %69 = vmatpush.msra.mxu0 %v35
  %70 = vmatpush.msra.mxu0 %v34
  %71 = vmatpush.msra.mxu0 %v33
  %72 = vmatmul.f32.gmra.mxu0 %v54
  %v73 = vpop.f32.mrf.mxu0
  %v74 = vadd.f32 %v50, %v73
  %75 = vdwg.mxu0
  %v76 = vmax.f32 %v74, 0.0
  %v77 = vld [vmem:[%s3] sm:$0xff]
  %v78 = vld [vmem:[%s3 + $0x8] sm:$0xff]
  %v79 = vld [vmem:[%s3 + $0x10] sm:$0xff]
  %v80 = vld [vmem:[%s3 + $0x18] sm:$0xff]
  %v81 = vld [vmem:[%s3 + $0x20] sm:$0xff]
  %v82 = vld [vmem:[%s3 + $0x28] sm:$0xff]
  %v83 = vld [vmem:[%s3 + $0x30] sm:$0xff]
  %v84 = vld [vmem:[%s3 + $0x38] sm:$0xff]
  %v85 = vld [vmem:[%s3 + $0x40] sm:$0xff]
  %v86 = vld [vmem:[%s3 + $0x48] sm:$0xff]
  %v87 = vld [vmem:[%s3 + $0x50] sm:$0xff]
  %v88 = vld [vmem:[%s3 + $0x58] sm:$0xff]
  %v89 = vld [vmem:[%s3 + $0x60] sm:$0xff]
  %v90 = vld [vmem:[%s3 + $0x68] sm:$0xff]
  %v91 = vld [vmem:[%s3 + $0x70] sm:$0xff]
  %v92 = vld [vmem:[%s3 + $0x78] sm:$0xff]
  %v93 = vld [vmem:[%s4] sm:$0x1]
  %v95 = vperm.slane %v93, 0
  %97 = vmatpush.msra.mxu0 %v92
  %98 = vmatpush.msra.mxu0 %v91
  %99 = vmatpush.msra.mxu0 %v90
  %100 = vmatpush.msra.mxu0 %v89
  %101 = vmatpush.msra.mxu0 %v88
  %102 = vmatpush.msra.mxu0 %v87
  %103 = vmatpush.msra.mxu0 %v86
  %104 = vmatpush.msra.mxu0 %v85
  %105 = vmatpush.msra.mxu0 %v84
  %106 = vmatpush.msra.mxu0 %v83
  %107 = vmatpush.msra.mxu0 %v82
  %108 = vmatpush.msra.mxu0 %v81
  %109 = vmatpush.msra.mxu0 %v80
  %110 = vmatpush.msra.mxu0 %v79
  %111 = vmatpush.msra.mxu0 %v78
  %112 = vmatpush.msra.mxu0 %v77
  %113 = vmatmul.f32.gmra.mxu0 %v76
  %v114 = vpop.f32.mrf.mxu0
  %v115 = vadd.f32 %v95, %v114
  %116 = vdwg.mxu0
  %v117 = vmax.f32 %v115, 0.0
  %v118 = vld [vmem:[%s5] sm:$0xff]
  %v119 = vld [vmem:[%s6] sm:$0x1]
  %v121 = vperm.slane %v119, 0
  %vm123 = vcmask 64512
  %v125 = vsel %vm123, %v117, 0
  %127 = vmatpush.msra.mxu0 0.0
  %128 = vmatpush.msra.mxu0 0.0
  %129 = vmatpush.msra.mxu0 0.0
  %130 = vmatpush.msra.mxu0 0.0
  %131 = vmatpush.msra.mxu0 0.0
  %132 = vmatpush.msra.mxu0 0.0
  %133 = vmatpush.msra.mxu0 0.0
  %134 = vmatpush.msra.mxu0 0.0
  %135 = vmatpush.msra.mxu0 0.0
  %136 = vmatpush.msra.mxu0 0.0
  %137 = vmatpush.msra.mxu0 0.0
  %138 = vmatpush.msra.mxu0 0.0
  %139 = vmatpush.msra.mxu0 0.0
  %140 = vmatpush.msra.mxu0 0.0
  %141 = vmatpush.msra.mxu0 0.0
  %142 = vmatpush.msra.mxu0 %v118
  %143 = vmatmul.f32.gmra.mxu0 %v125
  %v144 = vpop.f32.mrf.mxu0
  %v145 = vadd.f32 %v121, %v144
  %146 = vdwg.mxu0
  %v147 = vmax.f32 %v145, 0.0
  %v148 = vld [vmem:[%s7] sm:$0xff]
  %v149 = vld [vmem:[%s7 + $0x8] sm:$0xff]
  %v150 = vld [vmem:[%s7 + $0x10] sm:$0xff]
  %v151 = vld [vmem:[%s7 + $0x18] sm:$0xff]
  %v152 = vld [vmem:[%s7 + $0x20] sm:$0xff]
  %v153 = vld [vmem:[%s7 + $0x28] sm:$0xff]
  %v154 = vld [vmem:[%s7 + $0x30] sm:$0xff]
  %v155 = vld [vmem:[%s7 + $0x38] sm:$0xff]
  %v156 = vld [vmem:[%s7 + $0x40] sm:$0xff]
  %v157 = vld [vmem:[%s7 + $0x48] sm:$0xff]
  %v158 = vld [vmem:[%s7 + $0x50] sm:$0xff]
  %v159 = vld [vmem:[%s7 + $0x58] sm:$0xff]
  %v160 = vld [vmem:[%s7 + $0x60] sm:$0xff]
  %v161 = vld [vmem:[%s7 + $0x68] sm:$0xff]
  %v162 = vld [vmem:[%s7 + $0x70] sm:$0xff]
  %v163 = vld [vmem:[%s7 + $0x78] sm:$0xff]
  %v164 = vld [vmem:[%s8] sm:$0x1]
  %v166 = vperm.slane %v164, 0
  %168 = vmatpush.msra.mxu0 %v163
  %169 = vmatpush.msra.mxu0 %v162
  %170 = vmatpush.msra.mxu0 %v161
  %171 = vmatpush.msra.mxu0 %v160
  %172 = vmatpush.msra.mxu0 %v159
  %173 = vmatpush.msra.mxu0 %v158
  %174 = vmatpush.msra.mxu0 %v157
  %175 = vmatpush.msra.mxu0 %v156
  %176 = vmatpush.msra.mxu0 %v155
  %177 = vmatpush.msra.mxu0 %v154
  %178 = vmatpush.msra.mxu0 %v153
  %179 = vmatpush.msra.mxu0 %v152
  %180 = vmatpush.msra.mxu0 %v151
  %181 = vmatpush.msra.mxu0 %v150
  %182 = vmatpush.msra.mxu0 %v149
  %183 = vmatpush.msra.mxu0 %v148
  %184 = vmatmul.f32.gmra.mxu0 %v147
  %v185 = vpop.f32.mrf.mxu0
  %v186 = vadd.f32 %v166, %v185
  %187 = vdwg.mxu0
  %v188 = vmax.f32 %v186, 0.0
  %v189 = vlaneseq
  %v190 = vand.u32 %v189, 127
  %vm191 = vcmp.lt.s32.totalorder %v190, 3
  %vm192 = vcmp.ge.s32.totalorder %v190, 3
  %vm193 = vcmp.lt.s32.totalorder %v190, 6
  %vm194 = vmand %vm192, %vm193
  %v195 = vsel %vm191, %v188, -1e+30
  %v196 = vsel %vm123, %v195, -inf
  %197 = vmax.xlane.f32.xlu0 %v196
  %v198 = vpop.xlane.xlu0 %197
  %v199 = vsub.f32 %v188, %v198
  %v200 = vmul.f32 %v199, 1.442695
  %v201 = vpow.pop %v200
  %v202 = vsel %vm191, %v201, 0.0
  %v203 = vsel %vm123, %v202, 0.0
  %204 = vadd.xlane.f32.xlu0 %v203
  %v205 = vpop.xlane.xlu0 %204
  %v206 = vlog2.pop %v205
  %v207 = vmul.f32 %v206, 0.6931472
  %v208 = vsub.f32 %v199, %v207
  %v209 = vsel %vm194, %v188, -1e+30
  %v210 = vsel %vm123, %v209, -inf
  %211 = vmax.xlane.f32.xlu0 %v210
  %v212 = vpop.xlane.xlu0 %211
  %v213 = vsub.f32 %v188, %v212
  %v214 = vmul.f32 %v213, 1.442695
  %v215 = vpow.pop %v214
  %v216 = vsel %vm194, %v215, 0.0
  %v217 = vsel %vm123, %v216, 0.0
  %218 = vadd.xlane.f32.xlu0 %v217
  %v219 = vpop.xlane.xlu0 %218
  %v220 = vlog2.pop %v219
  %v221 = vmul.f32 %v220, 0.6931472
  %v222 = vsub.f32 %v213, %v221
  %v223 = vsel %vm194, %v222, 0.0
  %v224 = vsel %vm191, %v208, %v223
  %225 = vst.msk [vmem:[%s9] sm:$0xff] %vm123, %v224
  // Predicated region
  $region38: #{net_multitask_forward.3} parent=0 // pred_check
    _
  $region39: #{net_multitask_forward.3} parent=0 // pred_check_branch
    %227 = sbr.rel (0) target = $region41
  $region40: #{net_multitask_forward.3} parent=0 // pred_region
    _
  $region41: #{net_multitask_forward.3} parent=0 // pred_fallthru
    _
  // Predicated region
  $region42: #{net_multitask_forward.3} parent=0 // pred_check
    _
  $region43: #{net_multitask_forward.3} parent=0 // pred_check_branch
    %229 = sbr.rel (0) target = $region45
  $region44: #{net_multitask_forward.3} parent=0 // pred_region
    _
  $region45: #{net_multitask_forward.3} parent=0 // pred_fallthru
    _

</llo_original>
